<compile_context>
chip_gen: v7x
topology: tpu7x:2x2x1
jax: 0.10.0
libtpu: 0.0.40
codegen_flags: <defaults>
</compile_context>

<pallas_src>
import math

import jax
import jax.numpy as jnp
from jax.experimental import pallas as pl
from jax.experimental.pallas import tpu as pltpu

# ------------------------- model hyper-parameters ---------------------------
BATCH = 2
SEQ = 8
HIDDEN = 32          # stands in for 768
NUM_HEADS = 2
HEAD_DIM = HIDDEN // NUM_HEADS
FFN = 64
NUM_CLASSES = 7
VOCAB = 100
TYPE_VOCAB = 2
LN_EPS = 1e-12
LANE = 128                    # classifier output padded to a full lane width
TOKENS = BATCH * SEQ          # all batches fused into one row slab


# --------------------------- in-kernel helpers -------------------------------
def _layernorm(x, gamma, beta):
    mu = jnp.mean(x, axis=-1, keepdims=True)
    var = jnp.mean((x - mu) ** 2, axis=-1, keepdims=True)
    return (x - mu) * jax.lax.rsqrt(var + LN_EPS) * gamma + beta


# ----------------------------- fused kernel ----------------------------------
def bert_fused_kernel(x_ref, bias_ref, g0_ref, b0_ref,
                      wqkv_ref, bqkv_ref, wo_ref, bo_ref, g1_ref, b1_ref,
                      wi_ref, bi_ref, wo2_ref, bo2_ref, g2_ref, b2_ref,
                      wp_ref, bp_ref, wc_ref, bc_ref,
                      out_ref):
    # Whole batch as one (T, H) slab, everything resident in VMEM.
    # Embedding LayerNorm fused here (raw summed embeddings arrive from HBM).
    x2 = _layernorm(x_ref[...], g0_ref[...], b0_ref[...])          # (T, H)

    # ---- fused QKV projection: one (16,32)@(32,96) MXU push ----
    # 1/sqrt(HEAD_DIM) is pre-folded into the q columns of wqkv at init time.
    qkv = jnp.dot(x2, wqkv_ref[...],
                  preferred_element_type=jnp.float32) + bqkv_ref[...]   # (T, 3H)

    bias = bias_ref[...]   # (T, T) additive mask, precomputed in the wrapper

    # ---- attention per head on flat (T, T) scores ----
    # Cross-batch pairs and padded keys carry -1e9 in `bias`, so softmax zeroes
    # them exactly; no head/batch leading-axis gymnastics needed.
    ctx_parts = []
    for h in range(NUM_HEADS):                                     # static, tiny
        q_h = qkv[:, h * HEAD_DIM:(h + 1) * HEAD_DIM]              # (T, HD)
        k_h = qkv[:, HIDDEN + h * HEAD_DIM:HIDDEN + (h + 1) * HEAD_DIM]
        v_h = qkv[:, 2 * HIDDEN + h * HEAD_DIM:2 * HIDDEN + (h + 1) * HEAD_DIM]
        # TODO(synk): at KoBERT scale produce K pre-transposed (HD, T) so this
        # contraction is a straight MXU feed with no XLU transpose.
        s = jnp.einsum('qd,kd->qk', q_h, k_h,
                       preferred_element_type=jnp.float32) + bias  # (T, T)
        s = s - jnp.max(s, axis=-1, keepdims=True)
        p = jnp.exp(s)
        p = p * pl.reciprocal(jnp.sum(p, axis=-1, keepdims=True), approx=True)
        ctx_parts.append(jnp.dot(p, v_h,
                                 preferred_element_type=jnp.float32))  # (T, HD)
    ctx2 = jnp.concatenate(ctx_parts, axis=-1)                     # (T, H)

    # Single output-projection contraction (accumulates in the MXU).
    attn = jnp.dot(ctx2, wo_ref[...],
                   preferred_element_type=jnp.float32) + bo_ref[...]
    h1 = _layernorm(x2 + attn, g1_ref[...], b1_ref[...])

    # ---- feed-forward ----
    inter = jnp.dot(h1, wi_ref[...], preferred_element_type=jnp.float32) + bi_ref[...]
    inter = jax.nn.gelu(inter, approximate=True)
    # TODO(synk): standard BERT uses the exact (erf) GELU; tanh approximation kept.
    ffn = jnp.dot(inter, wo2_ref[...], preferred_element_type=jnp.float32) + bo2_ref[...]
    h2 = _layernorm(h1 + ffn, g2_ref[...], b2_ref[...])            # (T, H)

    # ---- pooler (tanh dense) + classifier, fused ----
    # Evaluated on ALL rows (same number of MXU pushes at this size); the
    # wrapper keeps only the CLS rows.  Output is a fully (8,128)-aligned,
    # unmasked (16, 128) store.
    pooled = jnp.tanh(jnp.dot(h2, wp_ref[...],
                              preferred_element_type=jnp.float32) + bp_ref[...])
    out_ref[...] = (jnp.dot(pooled, wc_ref[...],
                            preferred_element_type=jnp.float32)
                    + bc_ref[...])                                  # (T, 128)


# ------------------------------- parameters ----------------------------------
def init_params(key):
    ks = jax.random.split(key, 16)
    n = lambda k, shape: (0.02 * jax.random.normal(k, shape)).astype(jnp.float32)
    ones = lambda shape: jnp.ones(shape, jnp.float32)
    zeros = lambda shape: jnp.zeros(shape, jnp.float32)
    attn_scale = 1.0 / math.sqrt(HEAD_DIM)   # folded into the Q projection (free)
    return {
        # embeddings (gathers are plain-JAX glue; their LayerNorm runs in-kernel)
        "word_emb": n(ks[0], (VOCAB, HIDDEN)),
        "type_emb": n(ks[1], (TYPE_VOCAB, HIDDEN)),
        "pos_emb": n(ks[2], (SEQ, HIDDEN)),
        "emb_g": ones((HIDDEN,)), "emb_b": zeros((HIDDEN,)),
        # encoder layer (1/sqrt(HEAD_DIM) pre-folded into wq; bq is zero anyway)
        "wq": n(ks[3], (HIDDEN, HIDDEN)) * attn_scale, "bq": zeros((1, HIDDEN)),
        "wk": n(ks[4], (HIDDEN, HIDDEN)), "bk": zeros((1, HIDDEN)),
        "wv": n(ks[5], (HIDDEN, HIDDEN)), "bv": zeros((1, HIDDEN)),
        "wo": n(ks[6], (HIDDEN, HIDDEN)), "bo": zeros((1, HIDDEN)),
        "ln1_g": ones((1, HIDDEN)), "ln1_b": zeros((1, HIDDEN)),
        "wi": n(ks[7], (HIDDEN, FFN)), "bi": zeros((1, FFN)),
        "wo2": n(ks[8], (FFN, HIDDEN)), "bo2": zeros((1, HIDDEN)),
        "ln2_g": ones((1, HIDDEN)), "ln2_b": zeros((1, HIDDEN)),
        # pooler + classifier head
        "wp": n(ks[9], (HIDDEN, HIDDEN)), "bp": zeros((1, HIDDEN)),
        "wc": n(ks[10], (HIDDEN, NUM_CLASSES)), "bc": zeros((1, NUM_CLASSES)),
    }


# ------------------------------- forward pass --------------------------------
def bert_classifier_forward(params, token_ids, valid_length, segment_ids):
    B, S = token_ids.shape

    # gen_attention_mask: key j of example i is valid iff j < valid_length[i].
    # Precompute the ADDITIVE bias over the flat (T, T) attention: 0 where the
    # key is a valid token of the SAME example, -1e9 otherwise (padding mask
    # plus cross-batch mask).  Done once in the wrapper -> zero in-kernel cost.
    key_ok = (jnp.arange(S)[None, :] < valid_length[:, None]).reshape(B * S)
    batch_of = jnp.repeat(jnp.arange(B), S)
    same_batch = batch_of[:, None] == batch_of[None, :]
    attn_bias = jnp.where(same_batch & key_ok[None, :], 0.0, -1e9).astype(jnp.float32)

    # embeddings: gathers stay in XLA glue; LayerNorm happens inside the kernel.
    emb = (params["word_emb"][token_ids]
           + params["type_emb"][segment_ids]
           + params["pos_emb"][None, :S, :]).reshape(B * S, HIDDEN)

    # Layout plumbing (free, one-time XLA ops): fused QKV weight / bias, and
    # classifier weights zero-padded to a full 128-lane slab so the kernel's
    # only HBM writeback is lane- and sublane-dense.
    w_qkv = jnp.concatenate([params["wq"], params["wk"], params["wv"]], axis=1)
    b_qkv = jnp.concatenate([params["bq"], params["bk"], params["bv"]], axis=1)
    pad = LANE - NUM_CLASSES
    wc_pad = jnp.pad(params["wc"], ((0, 0), (0, pad)))
    bc_pad = jnp.pad(params["bc"], ((0, 0), (0, pad)))

    inputs = [
        emb, attn_bias,
        params["emb_g"].reshape(1, HIDDEN), params["emb_b"].reshape(1, HIDDEN),
        w_qkv, b_qkv,
        params["wo"], params["bo"],
        params["ln1_g"], params["ln1_b"],
        params["wi"], params["bi"], params["wo2"], params["bo2"],
        params["ln2_g"], params["ln2_b"],
        params["wp"], params["bp"],
        wc_pad, bc_pad,
    ]

    # One fused, gridless pallas_call: emb-LN + encoder layer + pooler +
    # classifier.  Everything is pinned resident in VMEM for the single
    # invocation; no grid steps, no double-buffering, single launch.
    out = pl.pallas_call(
        bert_fused_kernel,
        out_shape=jax.ShapeDtypeStruct((TOKENS, LANE), jnp.float32),
        in_specs=[pl.BlockSpec(memory_space=pltpu.MemorySpace.VMEM)
                  for _ in inputs],
        out_specs=pl.BlockSpec(memory_space=pltpu.MemorySpace.VMEM),
    )(*inputs)

    # CLS rows sit at 0, S, 2S, ...; lanes >= NUM_CLASSES are zero padding.
    return out[::SEQ, :NUM_CLASSES]                  # (B, NUM_CLASSES)


if __name__ == "__main__":
    key = jax.random.PRNGKey(0)
    k_param, k_tok, k_seg = jax.random.split(key, 3)

    params = init_params(k_param)
    token_ids = jax.random.randint(k_tok, (BATCH, SEQ), 0, VOCAB, dtype=jnp.int32)
    segment_ids = jnp.zeros((BATCH, SEQ), dtype=jnp.int32)
    valid_length = jnp.array([5, SEQ], dtype=jnp.int32)

    fwd = jax.jit(bert_classifier_forward)
    logits = fwd(params, token_ids, valid_length, segment_ids)
    logits = jax.block_until_ready(logits)
    assert logits.shape == (BATCH, NUM_CLASSES)
    assert bool(jnp.all(jnp.isfinite(logits)))
    print("KERNEL_OK")
</pallas_src>

<mosaic_0001>
module attributes {stable_mosaic.version = 11 : i64} {
  func.func @bert_fused_kernel(%arg0: memref<16x32xf32, #tpu.memory_space<vmem>>, %arg1: memref<16x16xf32, #tpu.memory_space<vmem>>, %arg2: memref<1x32xf32, #tpu.memory_space<vmem>>, %arg3: memref<1x32xf32, #tpu.memory_space<vmem>>, %arg4: memref<32x96xf32, #tpu.memory_space<vmem>>, %arg5: memref<1x96xf32, #tpu.memory_space<vmem>>, %arg6: memref<32x32xf32, #tpu.memory_space<vmem>>, %arg7: memref<1x32xf32, #tpu.memory_space<vmem>>, %arg8: memref<1x32xf32, #tpu.memory_space<vmem>>, %arg9: memref<1x32xf32, #tpu.memory_space<vmem>>, %arg10: memref<32x64xf32, #tpu.memory_space<vmem>>, %arg11: memref<1x64xf32, #tpu.memory_space<vmem>>, %arg12: memref<64x32xf32, #tpu.memory_space<vmem>>, %arg13: memref<1x32xf32, #tpu.memory_space<vmem>>, %arg14: memref<1x32xf32, #tpu.memory_space<vmem>>, %arg15: memref<1x32xf32, #tpu.memory_space<vmem>>, %arg16: memref<32x32xf32, #tpu.memory_space<vmem>>, %arg17: memref<1x32xf32, #tpu.memory_space<vmem>>, %arg18: memref<32x128xf32, #tpu.memory_space<vmem>>, %arg19: memref<1x128xf32, #tpu.memory_space<vmem>>, %arg20: memref<16x128xf32, #tpu.memory_space<vmem>>) attributes {dimension_semantics = [], scalar_prefetch = 0 : i64, scratch_operands = 0 : i64, tpu.core_type = #tpu.core_type<tc>} {
    %c0 = arith.constant 0 : index
    %c0_0 = arith.constant 0 : index
    %0 = vector.load %arg0[%c0, %c0_0] : memref<16x32xf32, #tpu.memory_space<vmem>>, vector<16x32xf32>
    %c0_1 = arith.constant 0 : index
    %c0_2 = arith.constant 0 : index
    %1 = vector.load %arg2[%c0_1, %c0_2] : memref<1x32xf32, #tpu.memory_space<vmem>>, vector<1x32xf32>
    %c0_3 = arith.constant 0 : index
    %c0_4 = arith.constant 0 : index
    %2 = vector.load %arg3[%c0_3, %c0_4] : memref<1x32xf32, #tpu.memory_space<vmem>>, vector<1x32xf32>
    %cst = arith.constant dense<0.000000e+00> : vector<16xf32>
    %3 = vector.multi_reduction <add>, %0, %cst [1] : vector<16x32xf32> to vector<16xf32>
    %4 = vector.shape_cast %3 : vector<16xf32> to vector<16x1xf32>
    %cst_5 = arith.constant 3.200000e+01 : f32
    %5 = vector.broadcast %cst_5 : f32 to vector<16x1xf32>
    %6 = arith.divf %4, %5 : vector<16x1xf32>
    %7 = vector.broadcast %6 : vector<16x1xf32> to vector<16x32xf32>
    %8 = arith.subf %0, %7 : vector<16x32xf32>
    %9 = arith.mulf %8, %8 : vector<16x32xf32>
    %cst_6 = arith.constant dense<0.000000e+00> : vector<16xf32>
    %10 = vector.multi_reduction <add>, %9, %cst_6 [1] : vector<16x32xf32> to vector<16xf32>
    %11 = vector.shape_cast %10 : vector<16xf32> to vector<16x1xf32>
    %cst_7 = arith.constant 3.200000e+01 : f32
    %12 = vector.broadcast %cst_7 : f32 to vector<16x1xf32>
    %13 = arith.divf %11, %12 : vector<16x1xf32>
    %14 = vector.broadcast %6 : vector<16x1xf32> to vector<16x32xf32>
    %15 = arith.subf %0, %14 : vector<16x32xf32>
    %cst_8 = arith.constant 9.99999996E-13 : f32
    %16 = vector.broadcast %cst_8 : f32 to vector<16x1xf32>
    %17 = arith.addf %13, %16 : vector<16x1xf32>
    %18 = math.rsqrt %17 : vector<16x1xf32>
    %19 = vector.broadcast %18 : vector<16x1xf32> to vector<16x32xf32>
    %20 = arith.mulf %15, %19 : vector<16x32xf32>
    %21 = vector.broadcast %1 : vector<1x32xf32> to vector<16x32xf32>
    %22 = arith.mulf %20, %21 : vector<16x32xf32>
    %23 = vector.broadcast %2 : vector<1x32xf32> to vector<16x32xf32>
    %24 = arith.addf %22, %23 : vector<16x32xf32>
    %c0_9 = arith.constant 0 : index
    %c0_10 = arith.constant 0 : index
    %25 = vector.load %arg4[%c0_9, %c0_10] : memref<32x96xf32, #tpu.memory_space<vmem>>, vector<32x96xf32>
    %cst_11 = arith.constant dense<0.000000e+00> : vector<16x96xf32>
    %26 = tpu.matmul %24, %25, %cst_11 {dimension_numbers = #tpu.dot_dimension_numbers<[1], [0], [0], [1], [0, 0, 1, 1], [], []>} : vector<16x32xf32>, vector<32x96xf32>, vector<16x96xf32> -> vector<16x96xf32>
    %c0_12 = arith.constant 0 : index
    %c0_13 = arith.constant 0 : index
    %27 = vector.load %arg5[%c0_12, %c0_13] : memref<1x96xf32, #tpu.memory_space<vmem>>, vector<1x96xf32>
    %28 = vector.broadcast %27 : vector<1x96xf32> to vector<16x96xf32>
    %29 = arith.addf %26, %28 : vector<16x96xf32>
    %c0_14 = arith.constant 0 : index
    %c0_15 = arith.constant 0 : index
    %30 = vector.load %arg1[%c0_14, %c0_15] : memref<16x16xf32, #tpu.memory_space<vmem>>, vector<16x16xf32>
    %31 = vector.extract_strided_slice %29 {offsets = [0, 0], sizes = [16, 16], strides = [1, 1]} : vector<16x96xf32> to vector<16x16xf32>
    %32 = vector.extract_strided_slice %29 {offsets = [0, 32], sizes = [16, 16], strides = [1, 1]} : vector<16x96xf32> to vector<16x16xf32>
    %33 = vector.extract_strided_slice %29 {offsets = [0, 64], sizes = [16, 16], strides = [1, 1]} : vector<16x96xf32> to vector<16x16xf32>
    "tpu.trace_start"() <{level = 10 : i32, message = "qd,kd->qk"}> : () -> ()
    %cst_16 = arith.constant dense<0.000000e+00> : vector<16x16xf32>
    %34 = tpu.matmul %31, %32, %cst_16 {dimension_numbers = #tpu.dot_dimension_numbers<[1], [1], [0], [0], [0, 0, 1, 0], [], []>} : vector<16x16xf32>, vector<16x16xf32>, vector<16x16xf32> -> vector<16x16xf32>
    "tpu.trace_stop"() : () -> ()
    %35 = arith.addf %34, %30 : vector<16x16xf32>
    %cst_17 = arith.constant dense<0xFF800000> : vector<16xf32>
    %36 = vector.multi_reduction <maximumf>, %35, %cst_17 [1] : vector<16x16xf32> to vector<16xf32>
    %37 = vector.shape_cast %36 : vector<16xf32> to vector<16x1xf32>
    %38 = vector.broadcast %37 : vector<16x1xf32> to vector<16x16xf32>
    %39 = arith.subf %35, %38 : vector<16x16xf32>
    %40 = math.exp %39 : vector<16x16xf32>
    %cst_18 = arith.constant dense<0.000000e+00> : vector<16xf32>
    %41 = vector.multi_reduction <add>, %40, %cst_18 [1] : vector<16x16xf32> to vector<16xf32>
    %42 = vector.shape_cast %41 : vector<16xf32> to vector<16x1xf32>
    %43 = tpu.reciprocal %42 {approx = true} : vector<16x1xf32> -> vector<16x1xf32>
    %44 = vector.broadcast %43 : vector<16x1xf32> to vector<16x16xf32>
    %45 = arith.mulf %40, %44 : vector<16x16xf32>
    %cst_19 = arith.constant dense<0.000000e+00> : vector<16x16xf32>
    %46 = tpu.matmul %45, %33, %cst_19 {dimension_numbers = #tpu.dot_dimension_numbers<[1], [0], [0], [1], [0, 0, 1, 1], [], []>} : vector<16x16xf32>, vector<16x16xf32>, vector<16x16xf32> -> vector<16x16xf32>
    %47 = vector.extract_strided_slice %29 {offsets = [0, 16], sizes = [16, 16], strides = [1, 1]} : vector<16x96xf32> to vector<16x16xf32>
    %48 = vector.extract_strided_slice %29 {offsets = [0, 48], sizes = [16, 16], strides = [1, 1]} : vector<16x96xf32> to vector<16x16xf32>
    %49 = vector.extract_strided_slice %29 {offsets = [0, 80], sizes = [16, 16], strides = [1, 1]} : vector<16x96xf32> to vector<16x16xf32>
    "tpu.trace_start"() <{level = 10 : i32, message = "qd,kd->qk"}> : () -> ()
    %cst_20 = arith.constant dense<0.000000e+00> : vector<16x16xf32>
    %50 = tpu.matmul %47, %48, %cst_20 {dimension_numbers = #tpu.dot_dimension_numbers<[1], [1], [0], [0], [0, 0, 1, 0], [], []>} : vector<16x16xf32>, vector<16x16xf32>, vector<16x16xf32> -> vector<16x16xf32>
    "tpu.trace_stop"() : () -> ()
    %51 = arith.addf %50, %30 : vector<16x16xf32>
    %cst_21 = arith.constant dense<0xFF800000> : vector<16xf32>
    %52 = vector.multi_reduction <maximumf>, %51, %cst_21 [1] : vector<16x16xf32> to vector<16xf32>
    %53 = vector.shape_cast %52 : vector<16xf32> to vector<16x1xf32>
    %54 = vector.broadcast %53 : vector<16x1xf32> to vector<16x16xf32>
    %55 = arith.subf %51, %54 : vector<16x16xf32>
    %56 = math.exp %55 : vector<16x16xf32>
    %cst_22 = arith.constant dense<0.000000e+00> : vector<16xf32>
    %57 = vector.multi_reduction <add>, %56, %cst_22 [1] : vector<16x16xf32> to vector<16xf32>
    %58 = vector.shape_cast %57 : vector<16xf32> to vector<16x1xf32>
    %59 = tpu.reciprocal %58 {approx = true} : vector<16x1xf32> -> vector<16x1xf32>
    %60 = vector.broadcast %59 : vector<16x1xf32> to vector<16x16xf32>
    %61 = arith.mulf %56, %60 : vector<16x16xf32>
    %cst_23 = arith.constant dense<0.000000e+00> : vector<16x16xf32>
    %62 = tpu.matmul %61, %49, %cst_23 {dimension_numbers = #tpu.dot_dimension_numbers<[1], [0], [0], [1], [0, 0, 1, 1], [], []>} : vector<16x16xf32>, vector<16x16xf32>, vector<16x16xf32> -> vector<16x16xf32>
    %63 = tpu.concatenate %46, %62 in 1 : vector<16x16xf32>, vector<16x16xf32> -> vector<16x32xf32>
    %c0_24 = arith.constant 0 : index
    %c0_25 = arith.constant 0 : index
    %64 = vector.load %arg6[%c0_24, %c0_25] : memref<32x32xf32, #tpu.memory_space<vmem>>, vector<32x32xf32>
    %cst_26 = arith.constant dense<0.000000e+00> : vector<16x32xf32>
    %65 = tpu.matmul %63, %64, %cst_26 {dimension_numbers = #tpu.dot_dimension_numbers<[1], [0], [0], [1], [0, 0, 1, 1], [], []>} : vector<16x32xf32>, vector<32x32xf32>, vector<16x32xf32> -> vector<16x32xf32>
    %c0_27 = arith.constant 0 : index
    %c0_28 = arith.constant 0 : index
    %66 = vector.load %arg7[%c0_27, %c0_28] : memref<1x32xf32, #tpu.memory_space<vmem>>, vector<1x32xf32>
    %67 = vector.broadcast %66 : vector<1x32xf32> to vector<16x32xf32>
    %68 = arith.addf %65, %67 : vector<16x32xf32>
    %69 = arith.addf %24, %68 : vector<16x32xf32>
    %c0_29 = arith.constant 0 : index
    %c0_30 = arith.constant 0 : index
    %70 = vector.load %arg8[%c0_29, %c0_30] : memref<1x32xf32, #tpu.memory_space<vmem>>, vector<1x32xf32>
    %c0_31 = arith.constant 0 : index
    %c0_32 = arith.constant 0 : index
    %71 = vector.load %arg9[%c0_31, %c0_32] : memref<1x32xf32, #tpu.memory_space<vmem>>, vector<1x32xf32>
    %cst_33 = arith.constant dense<0.000000e+00> : vector<16xf32>
    %72 = vector.multi_reduction <add>, %69, %cst_33 [1] : vector<16x32xf32> to vector<16xf32>
    %73 = vector.shape_cast %72 : vector<16xf32> to vector<16x1xf32>
    %cst_34 = arith.constant 3.200000e+01 : f32
    %74 = vector.broadcast %cst_34 : f32 to vector<16x1xf32>
    %75 = arith.divf %73, %74 : vector<16x1xf32>
    %76 = vector.broadcast %75 : vector<16x1xf32> to vector<16x32xf32>
    %77 = arith.subf %69, %76 : vector<16x32xf32>
    %78 = arith.mulf %77, %77 : vector<16x32xf32>
    %cst_35 = arith.constant dense<0.000000e+00> : vector<16xf32>
    %79 = vector.multi_reduction <add>, %78, %cst_35 [1] : vector<16x32xf32> to vector<16xf32>
    %80 = vector.shape_cast %79 : vector<16xf32> to vector<16x1xf32>
    %cst_36 = arith.constant 3.200000e+01 : f32
    %81 = vector.broadcast %cst_36 : f32 to vector<16x1xf32>
    %82 = arith.divf %80, %81 : vector<16x1xf32>
    %83 = vector.broadcast %75 : vector<16x1xf32> to vector<16x32xf32>
    %84 = arith.subf %69, %83 : vector<16x32xf32>
    %cst_37 = arith.constant 9.99999996E-13 : f32
    %85 = vector.broadcast %cst_37 : f32 to vector<16x1xf32>
    %86 = arith.addf %82, %85 : vector<16x1xf32>
    %87 = math.rsqrt %86 : vector<16x1xf32>
    %88 = vector.broadcast %87 : vector<16x1xf32> to vector<16x32xf32>
    %89 = arith.mulf %84, %88 : vector<16x32xf32>
    %90 = vector.broadcast %70 : vector<1x32xf32> to vector<16x32xf32>
    %91 = arith.mulf %89, %90 : vector<16x32xf32>
    %92 = vector.broadcast %71 : vector<1x32xf32> to vector<16x32xf32>
    %93 = arith.addf %91, %92 : vector<16x32xf32>
    %c0_38 = arith.constant 0 : index
    %c0_39 = arith.constant 0 : index
    %94 = vector.load %arg10[%c0_38, %c0_39] : memref<32x64xf32, #tpu.memory_space<vmem>>, vector<32x64xf32>
    %cst_40 = arith.constant dense<0.000000e+00> : vector<16x64xf32>
    %95 = tpu.matmul %93, %94, %cst_40 {dimension_numbers = #tpu.dot_dimension_numbers<[1], [0], [0], [1], [0, 0, 1, 1], [], []>} : vector<16x32xf32>, vector<32x64xf32>, vector<16x64xf32> -> vector<16x64xf32>
    %c0_41 = arith.constant 0 : index
    %c0_42 = arith.constant 0 : index
    %96 = vector.load %arg11[%c0_41, %c0_42] : memref<1x64xf32, #tpu.memory_space<vmem>>, vector<1x64xf32>
    %97 = vector.broadcast %96 : vector<1x64xf32> to vector<16x64xf32>
    %98 = arith.addf %95, %97 : vector<16x64xf32>
    %99 = arith.mulf %98, %98 : vector<16x64xf32>
    %100 = arith.mulf %98, %99 : vector<16x64xf32>
    %cst_43 = arith.constant 4.471500e-02 : f32
    %101 = vector.broadcast %cst_43 : f32 to vector<16x64xf32>
    %102 = arith.mulf %101, %100 : vector<16x64xf32>
    %103 = arith.addf %98, %102 : vector<16x64xf32>
    %cst_44 = arith.constant 0.797884583 : f32
    %104 = vector.broadcast %cst_44 : f32 to vector<16x64xf32>
    %105 = arith.mulf %104, %103 : vector<16x64xf32>
    %106 = math.tanh %105 : vector<16x64xf32>
    %cst_45 = arith.constant 1.000000e+00 : f32
    %107 = vector.broadcast %cst_45 : f32 to vector<16x64xf32>
    %108 = arith.addf %107, %106 : vector<16x64xf32>
    %cst_46 = arith.constant 5.000000e-01 : f32
    %109 = vector.broadcast %cst_46 : f32 to vector<16x64xf32>
    %110 = arith.mulf %109, %108 : vector<16x64xf32>
    %111 = arith.mulf %98, %110 : vector<16x64xf32>
    %c0_47 = arith.constant 0 : index
    %c0_48 = arith.constant 0 : index
    %112 = vector.load %arg12[%c0_47, %c0_48] : memref<64x32xf32, #tpu.memory_space<vmem>>, vector<64x32xf32>
    %cst_49 = arith.constant dense<0.000000e+00> : vector<16x32xf32>
    %113 = tpu.matmul %111, %112, %cst_49 {dimension_numbers = #tpu.dot_dimension_numbers<[1], [0], [0], [1], [0, 0, 1, 1], [], []>} : vector<16x64xf32>, vector<64x32xf32>, vector<16x32xf32> -> vector<16x32xf32>
    %c0_50 = arith.constant 0 : index
    %c0_51 = arith.constant 0 : index
    %114 = vector.load %arg13[%c0_50, %c0_51] : memref<1x32xf32, #tpu.memory_space<vmem>>, vector<1x32xf32>
    %115 = vector.broadcast %114 : vector<1x32xf32> to vector<16x32xf32>
    %116 = arith.addf %113, %115 : vector<16x32xf32>
    %117 = arith.addf %93, %116 : vector<16x32xf32>
    %c0_52 = arith.constant 0 : index
    %c0_53 = arith.constant 0 : index
    %118 = vector.load %arg14[%c0_52, %c0_53] : memref<1x32xf32, #tpu.memory_space<vmem>>, vector<1x32xf32>
    %c0_54 = arith.constant 0 : index
    %c0_55 = arith.constant 0 : index
    %119 = vector.load %arg15[%c0_54, %c0_55] : memref<1x32xf32, #tpu.memory_space<vmem>>, vector<1x32xf32>
    %cst_56 = arith.constant dense<0.000000e+00> : vector<16xf32>
    %120 = vector.multi_reduction <add>, %117, %cst_56 [1] : vector<16x32xf32> to vector<16xf32>
    %121 = vector.shape_cast %120 : vector<16xf32> to vector<16x1xf32>
    %cst_57 = arith.constant 3.200000e+01 : f32
    %122 = vector.broadcast %cst_57 : f32 to vector<16x1xf32>
    %123 = arith.divf %121, %122 : vector<16x1xf32>
    %124 = vector.broadcast %123 : vector<16x1xf32> to vector<16x32xf32>
    %125 = arith.subf %117, %124 : vector<16x32xf32>
    %126 = arith.mulf %125, %125 : vector<16x32xf32>
    %cst_58 = arith.constant dense<0.000000e+00> : vector<16xf32>
    %127 = vector.multi_reduction <add>, %126, %cst_58 [1] : vector<16x32xf32> to vector<16xf32>
    %128 = vector.shape_cast %127 : vector<16xf32> to vector<16x1xf32>
    %cst_59 = arith.constant 3.200000e+01 : f32
    %129 = vector.broadcast %cst_59 : f32 to vector<16x1xf32>
    %130 = arith.divf %128, %129 : vector<16x1xf32>
    %131 = vector.broadcast %123 : vector<16x1xf32> to vector<16x32xf32>
    %132 = arith.subf %117, %131 : vector<16x32xf32>
    %cst_60 = arith.constant 9.99999996E-13 : f32
    %133 = vector.broadcast %cst_60 : f32 to vector<16x1xf32>
    %134 = arith.addf %130, %133 : vector<16x1xf32>
    %135 = math.rsqrt %134 : vector<16x1xf32>
    %136 = vector.broadcast %135 : vector<16x1xf32> to vector<16x32xf32>
    %137 = arith.mulf %132, %136 : vector<16x32xf32>
    %138 = vector.broadcast %118 : vector<1x32xf32> to vector<16x32xf32>
    %139 = arith.mulf %137, %138 : vector<16x32xf32>
    %140 = vector.broadcast %119 : vector<1x32xf32> to vector<16x32xf32>
    %141 = arith.addf %139, %140 : vector<16x32xf32>
    %c0_61 = arith.constant 0 : index
    %c0_62 = arith.constant 0 : index
    %142 = vector.load %arg16[%c0_61, %c0_62] : memref<32x32xf32, #tpu.memory_space<vmem>>, vector<32x32xf32>
    %cst_63 = arith.constant dense<0.000000e+00> : vector<16x32xf32>
    %143 = tpu.matmul %141, %142, %cst_63 {dimension_numbers = #tpu.dot_dimension_numbers<[1], [0], [0], [1], [0, 0, 1, 1], [], []>} : vector<16x32xf32>, vector<32x32xf32>, vector<16x32xf32> -> vector<16x32xf32>
    %c0_64 = arith.constant 0 : index
    %c0_65 = arith.constant 0 : index
    %144 = vector.load %arg17[%c0_64, %c0_65] : memref<1x32xf32, #tpu.memory_space<vmem>>, vector<1x32xf32>
    %145 = vector.broadcast %144 : vector<1x32xf32> to vector<16x32xf32>
    %146 = arith.addf %143, %145 : vector<16x32xf32>
    %147 = math.tanh %146 : vector<16x32xf32>
    %c0_66 = arith.constant 0 : index
    %c0_67 = arith.constant 0 : index
    %148 = vector.load %arg18[%c0_66, %c0_67] : memref<32x128xf32, #tpu.memory_space<vmem>>, vector<32x128xf32>
    %cst_68 = arith.constant dense<0.000000e+00> : vector<16x128xf32>
    %149 = tpu.matmul %147, %148, %cst_68 {dimension_numbers = #tpu.dot_dimension_numbers<[1], [0], [0], [1], [0, 0, 1, 1], [], []>} : vector<16x32xf32>, vector<32x128xf32>, vector<16x128xf32> -> vector<16x128xf32>
    %c0_69 = arith.constant 0 : index
    %c0_70 = arith.constant 0 : index
    %150 = vector.load %arg19[%c0_69, %c0_70] : memref<1x128xf32, #tpu.memory_space<vmem>>, vector<1x128xf32>
    %151 = vector.broadcast %150 : vector<1x128xf32> to vector<16x128xf32>
    %152 = arith.addf %149, %151 : vector<16x128xf32>
    %c0_71 = arith.constant 0 : index
    %c0_72 = arith.constant 0 : index
    %153 = vector.load %arg20[%c0_71, %c0_72] : memref<16x128xf32, #tpu.memory_space<vmem>>, vector<16x128xf32>
    tpu.vector_store %arg20[%c0_71, %c0_72], %152 {strides = array<i32>} : memref<16x128xf32, #tpu.memory_space<vmem>>, vector<16x128xf32>,
    return
  }
}

</mosaic_0001>

<llo_original>
// kernel: bert_classifier_forward.1
$region0: #{bert_classifier_forward.1}
  #allocation0 [shape = 'u32[]', space=smem, size = 0x4, offset = 0x4, fixed_abs, tag = 'smem constant byte address 0x4 - core index']
  #allocation1 [shape = 'u32[144,128]{1,0:T(1,128)}', space=vmem, size = 0x12000, scoped, tag = 'internal scratch']
  %s0 = inlined_call_operand.vmem [shape: f32[16,32], index: 0, kind: input, shape index: {}]
  %s1 = inlined_call_operand.vmem [shape: f32[16,16], index: 1, kind: input, shape index: {}]
  %s2 = inlined_call_operand.vmem [shape: f32[1,32], index: 2, kind: input, shape index: {}]
  %s3 = inlined_call_operand.vmem [shape: f32[1,32], index: 3, kind: input, shape index: {}]
  %s4 = inlined_call_operand.vmem [shape: f32[32,96], index: 4, kind: input, shape index: {}]
  %s5 = inlined_call_operand.vmem [shape: f32[1,96], index: 5, kind: input, shape index: {}]
  %s6 = inlined_call_operand.vmem [shape: f32[32,32], index: 6, kind: input, shape index: {}]
  %s7 = inlined_call_operand.vmem [shape: f32[1,32], index: 7, kind: input, shape index: {}]
  %s8 = inlined_call_operand.vmem [shape: f32[1,32], index: 8, kind: input, shape index: {}]
  %s9 = inlined_call_operand.vmem [shape: f32[1,32], index: 9, kind: input, shape index: {}]
  %s10 = inlined_call_operand.vmem [shape: f32[32,64], index: 10, kind: input, shape index: {}]
  %s11 = inlined_call_operand.vmem [shape: f32[1,64], index: 11, kind: input, shape index: {}]
  %s12 = inlined_call_operand.vmem [shape: f32[64,32], index: 12, kind: input, shape index: {}]
  %s13 = inlined_call_operand.vmem [shape: f32[1,32], index: 13, kind: input, shape index: {}]
  %s14 = inlined_call_operand.vmem [shape: f32[1,32], index: 14, kind: input, shape index: {}]
  %s15 = inlined_call_operand.vmem [shape: f32[1,32], index: 15, kind: input, shape index: {}]
  %s16 = inlined_call_operand.vmem [shape: f32[32,32], index: 16, kind: input, shape index: {}]
  %s17 = inlined_call_operand.vmem [shape: f32[1,32], index: 17, kind: input, shape index: {}]
  %s18 = inlined_call_operand.vmem [shape: f32[32,128], index: 18, kind: input, shape index: {}]
  %s19 = inlined_call_operand.vmem [shape: f32[1,128], index: 19, kind: input, shape index: {}]
  %s20 = inlined_call_operand.vmem [shape: f32[16,128], index: 20, kind: output, shape index: {}]
  %s21 = sld [smem:[#allocation0]]
  $region90: #{bert_classifier_forward.1} parent=0
    _
  %s23 = ssub.s32 1, %s21
  %s24 = scalar_select 0, %s23, %s21
  // Predicated region
  $region2: #{bert_classifier_forward.1} parent=0 // pred_check
    _
  $region3: #{bert_classifier_forward.1} parent=0 // pred_check_branch
    %26 = sbr.rel (0) target = $region5
  $region4: #{bert_classifier_forward.1} parent=0 // pred_region
    _
  $region5: #{bert_classifier_forward.1} parent=0 // pred_fallthru
    _
  // Predicated region
  $region6: #{bert_classifier_forward.1} parent=0 // pred_check
    _
  $region7: #{bert_classifier_forward.1} parent=0 // pred_check_branch
    %28 = sbr.rel (0) target = $region9
  $region8: #{bert_classifier_forward.1} parent=0 // pred_region
    _
  $region9: #{bert_classifier_forward.1} parent=0 // pred_fallthru
    _
  // Predicated region
  $region10: #{bert_classifier_forward.1} parent=0 // pred_check
    _
  $region11: #{bert_classifier_forward.1} parent=0 // pred_check_branch
    %30 = sbr.rel (0) target = $region13
  $region12: #{bert_classifier_forward.1} parent=0 // pred_region
    _
  $region13: #{bert_classifier_forward.1} parent=0 // pred_fallthru
    _
  // Predicated region
  $region14: #{bert_classifier_forward.1} parent=0 // pred_check
    _
  $region15: #{bert_classifier_forward.1} parent=0 // pred_check_branch
    %32 = sbr.rel (0) target = $region17
  $region16: #{bert_classifier_forward.1} parent=0 // pred_region
    _
  $region17: #{bert_classifier_forward.1} parent=0 // pred_fallthru
    _
  // Predicated region
  $region18: #{bert_classifier_forward.1} parent=0 // pred_check
    _
  $region19: #{bert_classifier_forward.1} parent=0 // pred_check_branch
    %34 = sbr.rel (0) target = $region21
  $region20: #{bert_classifier_forward.1} parent=0 // pred_region
    _
  $region21: #{bert_classifier_forward.1} parent=0 // pred_fallthru
    _
  // Predicated region
  $region22: #{bert_classifier_forward.1} parent=0 // pred_check
    _
  $region23: #{bert_classifier_forward.1} parent=0 // pred_check_branch
    %36 = sbr.rel (0) target = $region25
  $region24: #{bert_classifier_forward.1} parent=0 // pred_region
    _
  $region25: #{bert_classifier_forward.1} parent=0 // pred_fallthru
    _
  // Predicated region
  $region26: #{bert_classifier_forward.1} parent=0 // pred_check
    _
  $region27: #{bert_classifier_forward.1} parent=0 // pred_check_branch
    %38 = sbr.rel (0) target = $region29
  $region28: #{bert_classifier_forward.1} parent=0 // pred_region
    _
  $region29: #{bert_classifier_forward.1} parent=0 // pred_fallthru
    _
  // Predicated region
  $region30: #{bert_classifier_forward.1} parent=0 // pred_check
    _
  $region31: #{bert_classifier_forward.1} parent=0 // pred_check_branch
    %40 = sbr.rel (0) target = $region33
  $region32: #{bert_classifier_forward.1} parent=0 // pred_region
    _
  $region33: #{bert_classifier_forward.1} parent=0 // pred_fallthru
    _
  // Predicated region
  $region34: #{bert_classifier_forward.1} parent=0 // pred_check
    _
  $region35: #{bert_classifier_forward.1} parent=0 // pred_check_branch
    %42 = sbr.rel (0) target = $region37
  $region36: #{bert_classifier_forward.1} parent=0 // pred_region
    _
  $region37: #{bert_classifier_forward.1} parent=0 // pred_fallthru
    _
  // Predicated region
  $region38: #{bert_classifier_forward.1} parent=0 // pred_check
    _
  $region39: #{bert_classifier_forward.1} parent=0 // pred_check_branch
    %44 = sbr.rel (0) target = $region41
  $region40: #{bert_classifier_forward.1} parent=0 // pred_region
    _
  $region41: #{bert_classifier_forward.1} parent=0 // pred_fallthru
    _
  // Predicated region
  $region42: #{bert_classifier_forward.1} parent=0 // pred_check
    _
  $region43: #{bert_classifier_forward.1} parent=0 // pred_check_branch
    %46 = sbr.rel (0) target = $region45
  $region44: #{bert_classifier_forward.1} parent=0 // pred_region
    _
  $region45: #{bert_classifier_forward.1} parent=0 // pred_fallthru
    _
  // Predicated region
  $region46: #{bert_classifier_forward.1} parent=0 // pred_check
    _
  $region47: #{bert_classifier_forward.1} parent=0 // pred_check_branch
    %48 = sbr.rel (0) target = $region49
  $region48: #{bert_classifier_forward.1} parent=0 // pred_region
    _
  $region49: #{bert_classifier_forward.1} parent=0 // pred_fallthru
    _
  // Predicated region
  $region50: #{bert_classifier_forward.1} parent=0 // pred_check
    _
  $region51: #{bert_classifier_forward.1} parent=0 // pred_check_branch
    %50 = sbr.rel (0) target = $region53
  $region52: #{bert_classifier_forward.1} parent=0 // pred_region
    _
  $region53: #{bert_classifier_forward.1} parent=0 // pred_fallthru
    _
  // Predicated region
  $region54: #{bert_classifier_forward.1} parent=0 // pred_check
    _
  $region55: #{bert_classifier_forward.1} parent=0 // pred_check_branch
    %52 = sbr.rel (0) target = $region57
  $region56: #{bert_classifier_forward.1} parent=0 // pred_region
    _
  $region57: #{bert_classifier_forward.1} parent=0 // pred_fallthru
    _
  // Predicated region
  $region58: #{bert_classifier_forward.1} parent=0 // pred_check
    _
  $region59: #{bert_classifier_forward.1} parent=0 // pred_check_branch
    %54 = sbr.rel (0) target = $region61
  $region60: #{bert_classifier_forward.1} parent=0 // pred_region
    _
  $region61: #{bert_classifier_forward.1} parent=0 // pred_fallthru
    _
  // Predicated region
  $region62: #{bert_classifier_forward.1} parent=0 // pred_check
    _
  $region63: #{bert_classifier_forward.1} parent=0 // pred_check_branch
    %56 = sbr.rel (0) target = $region65
  $region64: #{bert_classifier_forward.1} parent=0 // pred_region
    _
  $region65: #{bert_classifier_forward.1} parent=0 // pred_fallthru
    _
  // Predicated region
  $region66: #{bert_classifier_forward.1} parent=0 // pred_check
    _
  $region67: #{bert_classifier_forward.1} parent=0 // pred_check_branch
    %58 = sbr.rel (0) target = $region69
  $region68: #{bert_classifier_forward.1} parent=0 // pred_region
    _
  $region69: #{bert_classifier_forward.1} parent=0 // pred_fallthru
    _
  // Predicated region
  $region70: #{bert_classifier_forward.1} parent=0 // pred_check
    _
  $region71: #{bert_classifier_forward.1} parent=0 // pred_check_branch
    %60 = sbr.rel (0) target = $region73
  $region72: #{bert_classifier_forward.1} parent=0 // pred_region
    _
  $region73: #{bert_classifier_forward.1} parent=0 // pred_fallthru
    _
  // Predicated region
  $region74: #{bert_classifier_forward.1} parent=0 // pred_check
    _
  $region75: #{bert_classifier_forward.1} parent=0 // pred_check_branch
    %62 = sbr.rel (0) target = $region77
  $region76: #{bert_classifier_forward.1} parent=0 // pred_region
    _
  $region77: #{bert_classifier_forward.1} parent=0 // pred_fallthru
    _
  // Predicated region
  $region78: #{bert_classifier_forward.1} parent=0 // pred_check
    _
  $region79: #{bert_classifier_forward.1} parent=0 // pred_check_branch
    %64 = sbr.rel (0) target = $region81
  $region80: #{bert_classifier_forward.1} parent=0 // pred_region
    _
  $region81: #{bert_classifier_forward.1} parent=0 // pred_fallthru
    _
  %v65 = vld [vmem:[%s0] sm:$0xff]
  %v66 = vld [vmem:[%s0 + $0x8] sm:$0xff]
  %v67 = vld [vmem:[%s2] sm:$0x1]
  %v68 = vld [vmem:[%s3] sm:$0x1]
  %vm69 = vcmask 261120
  %v70 = vsel %vm69, %v65, 0.0
  %71 = vadd.xlane.f32.xlu0 %v70
  %v72 = vpop.xlane.xlu0 %71
  %v73 = vsel %vm69, %v66, 0.0
  %74 = vadd.xlane.f32.xlu0 %v73
  %v75 = vpop.xlane.xlu0 %74
  %v76 = vrcp.pop 32.0
  %v77 = vmul.f32 %v72, %v76
  %v78 = vmul.f32 %v75, %v76
  %v79 = vsub.f32 %v65, %v77
  %v80 = vsub.f32 %v66, %v78
  %v81 = vmul.f32 %v79, %v79
  %v82 = vmul.f32 %v80, %v80
  %v83 = vsel %vm69, %v81, 0.0
  %84 = vadd.xlane.f32.xlu0 %v83
  %v85 = vpop.xlane.xlu0 %84
  %v86 = vsel %vm69, %v82, 0.0
  %87 = vadd.xlane.f32.xlu0 %v86
  %v88 = vpop.xlane.xlu0 %87
  %v89 = vmul.f32 %v85, %v76
  %v90 = vmul.f32 %v88, %v76
  %v91 = vadd.f32 %v89, 1e-12
  %v92 = vadd.f32 %v90, 1e-12
  %v93 = vrsqrt.pop %v91
  %v94 = vrsqrt.pop %v92
  %v95 = vmul.f32 %v79, %v93
  %v96 = vmul.f32 %v80, %v94
  %v98 = vlaneseq
  %v99 = vshrl.u32 %v98, 7
  %v100 = vsub.s32 0, %v99
  %v101 = vrot.slane %v67, %v100
  %v103 = vmul.f32 %v95, %v101
  %v104 = vmul.f32 %v96, %v101
  %v106 = vlaneseq
  %v107 = vshrl.u32 %v106, 7
  %v108 = vsub.s32 0, %v107
  %v109 = vrot.slane %v68, %v108
  %v111 = vadd.f32 %v103, %v109
  %v112 = vadd.f32 %v104, %v109
  %v113 = vld [vmem:[%s4] sm:$0xff]
  %v114 = vld [vmem:[%s4 + $0x8] sm:$0xff]
  %v115 = vld [vmem:[%s4 + $0x10] sm:$0xff]
  %v116 = vld [vmem:[%s4 + $0x18] sm:$0xff]
  %v117 = vld [vmem:[%s5] sm:$0x1]
  %v119 = vlaneseq
  %v120 = vshrl.u32 %v119, 7
  %v121 = vsub.s32 0, %v120
  %v122 = vrot.slane %v117, %v121
  %v125 = vsel %vm69, %v111, 0
  %v128 = vsel %vm69, %v112, 0
  %130 = vmatprep.subr.mxu0 0.0
  %131 = vmatpush1.msra.mxu0 %v113
  %132 = vmatprep.subr.mxu0 0.0
  %133 = vmatpush1.msra.mxu0 %v114
  %134 = vmatprep.subr.mxu0 0.0
  %135 = vmatpush1.msra.mxu0 %v115
  %136 = vmatprep.subr.mxu0 0.0
  %137 = vmatpush1.msra.mxu0 %v116
  %138 = vmatprep.subr.mxu0 0.0
  %139 = vmatpush1.msra.mxu0 0.0
  %140 = vmatprep.subr.mxu0 0.0
  %141 = vmatpush1.msra.mxu0 0.0
  %142 = vmatprep.subr.mxu0 0.0
  %143 = vmatpush1.msra.mxu0 0.0
  %144 = vmatprep.subr.mxu0 0.0
  %145 = vmatpush1.msra.mxu0 0.0
  %146 = vmatprep.subr.mxu0 0.0
  %147 = vmatpush1.msra.mxu0 0.0
  %148 = vmatprep.subr.mxu0 0.0
  %149 = vmatpush1.msra.mxu0 0.0
  %150 = vmatprep.subr.mxu0 0.0
  %151 = vmatpush1.msra.mxu0 0.0
  %152 = vmatprep.subr.mxu0 0.0
  %153 = vmatpush1.msra.mxu0 0.0
  %154 = vmatprep.subr.mxu0 0.0
  %155 = vmatpush1.msra.mxu0 0.0
  %156 = vmatprep.subr.mxu0 0.0
  %157 = vmatpush1.msra.mxu0 0.0
  %158 = vmatprep.subr.mxu0 0.0
  %159 = vmatpush1.msra.mxu0 0.0
  %160 = vmatprep.subr.mxu0 0.0
  %161 = vmatpush1.msra.mxu0 0.0
  %162 = vmatprep.subr.mxu0 0.0
  %163 = vmatpush1.msra.mxu0 0.0
  %164 = vmatprep.subr.mxu0 0.0
  %165 = vmatpush1.msra.mxu0 0.0
  %166 = vmatprep.subr.mxu0 0.0
  %167 = vmatpush1.msra.mxu0 0.0
  %168 = vmatprep.subr.mxu0 0.0
  %169 = vmatpush1.msra.mxu0 0.0
  %170 = vmatprep.subr.mxu0 0.0
  %171 = vmatpush1.msra.mxu0 0.0
  %172 = vmatprep.subr.mxu0 0.0
  %173 = vmatpush1.msra.mxu0 0.0
  %174 = vmatprep.subr.mxu0 0.0
  %175 = vmatpush1.msra.mxu0 0.0
  %176 = vmatprep.subr.mxu0 0.0
  %177 = vmatpush1.msra.mxu0 0.0
  %178 = vmatprep.subr.mxu0 0.0
  %179 = vmatpush1.msra.mxu0 0.0
  %180 = vmatprep.subr.mxu0 0.0
  %181 = vmatpush1.msra.mxu0 0.0
  %182 = vmatprep.subr.mxu0 0.0
  %183 = vmatpush1.msra.mxu0 0.0
  %184 = vmatprep.subr.mxu0 0.0
  %185 = vmatpush1.msra.mxu0 0.0
  %186 = vmatprep.subr.mxu0 0.0
  %187 = vmatpush1.msra.mxu0 0.0
  %188 = vmatprep.subr.mxu0 0.0
  %189 = vmatpush1.msra.mxu0 0.0
  %190 = vmatprep.subr.mxu0 0.0
  %191 = vmatpush1.msra.mxu0 0.0
  %192 = vmatprep.subr.mxu0 0.0
  %193 = vmatpush1.msra.mxu0 0.0
  %194 = vmatprep.mubr.f32.mxu0 0.0
  %195 = vmatmul.mubr.f32.gmra.mrb[0].mxu0 %v125
  %v196 = vpop.f32.mrb[0].mxu0
  %v197 = vadd.f32 %v122, %v196
  %v198 = vpop.f32.mrb[0].mxu0
  %199 = vmatprep.mubr.f32.mxu0 0.0
  %200 = vmatmul.mubr.f32.gmra.mrb[0].mxu0 %v128
  %v201 = vpop.f32.mrb[0].mxu0
  %v202 = vadd.f32 %v122, %v201
  %v203 = vpop.f32.mrb[0].mxu0
  %204 = vdwg.mxu0
  %v205 = vld [vmem:[%s1] sm:$0xff]
  %v206 = vld [vmem:[%s1 + $0x8] sm:$0xff]
  %209 = vrot.lane.b32.xlu0 %v197, 96
  %v210 = vpop.permute.xlu0 %209
  %211 = vrot.lane.b32.xlu0 %v202, 96
  %v212 = vpop.permute.xlu0 %211
  %vm213 = vcmask 130048
  %v214 = vsel %vm213, %v197, 0
  %v216 = vsel %vm213, %v202, 0
  %v218 = vsel %vm213, %v210, 0
  %v220 = vsel %vm213, %v212, 0
  %222 = vmatprep.subr.mxu0 0.0
  %223 = vmatpush1.xpose.msra.mxu0 %v218
  %224 = vmatprep.subr.mxu0 0.0
  %225 = vmatpush1.xpose.msra.mxu0 %v220
  %226 = vmatprep.subr.mxu0 0.0
  %227 = vmatpush1.xpose.msra.mxu0 0.0
  %228 = vmatprep.subr.mxu0 0.0
  %229 = vmatpush1.xpose.msra.mxu0 0.0
  %230 = vmatprep.subr.mxu0 0.0
  %231 = vmatpush1.xpose.msra.mxu0 0.0
  %232 = vmatprep.subr.mxu0 0.0
  %233 = vmatpush1.xpose.msra.mxu0 0.0
  %234 = vmatprep.subr.mxu0 0.0
  %235 = vmatpush1.xpose.msra.mxu0 0.0
  %236 = vmatprep.subr.mxu0 0.0
  %237 = vmatpush1.xpose.msra.mxu0 0.0
  %238 = vmatprep.subr.mxu0 0.0
  %239 = vmatpush1.xpose.msra.mxu0 0.0
  %240 = vmatprep.subr.mxu0 0.0
  %241 = vmatpush1.xpose.msra.mxu0 0.0
  %242 = vmatprep.subr.mxu0 0.0
  %243 = vmatpush1.xpose.msra.mxu0 0.0
  %244 = vmatprep.subr.mxu0 0.0
  %245 = vmatpush1.xpose.msra.mxu0 0.0
  %246 = vmatprep.subr.mxu0 0.0
  %247 = vmatpush1.xpose.msra.mxu0 0.0
  %248 = vmatprep.subr.mxu0 0.0
  %249 = vmatpush1.xpose.msra.mxu0 0.0
  %250 = vmatprep.subr.mxu0 0.0
  %251 = vmatpush1.xpose.msra.mxu0 0.0
  %252 = vmatprep.subr.mxu0 0.0
  %253 = vmatpush1.xpose.msra.mxu0 0.0
  %254 = vmatprep.subr.mxu0 0.0
  %255 = vmatpush1.xpose.msra.mxu0 0.0
  %256 = vmatprep.subr.mxu0 0.0
  %257 = vmatpush1.xpose.msra.mxu0 0.0
  %258 = vmatprep.subr.mxu0 0.0
  %259 = vmatpush1.xpose.msra.mxu0 0.0
  %260 = vmatprep.subr.mxu0 0.0
  %261 = vmatpush1.xpose.msra.mxu0 0.0
  %262 = vmatprep.subr.mxu0 0.0
  %263 = vmatpush1.xpose.msra.mxu0 0.0
  %264 = vmatprep.subr.mxu0 0.0
  %265 = vmatpush1.xpose.msra.mxu0 0.0
  %266 = vmatprep.subr.mxu0 0.0
  %267 = vmatpush1.xpose.msra.mxu0 0.0
  %268 = vmatprep.subr.mxu0 0.0
  %269 = vmatpush1.xpose.msra.mxu0 0.0
  %270 = vmatprep.subr.mxu0 0.0
  %271 = vmatpush1.xpose.msra.mxu0 0.0
  %272 = vmatprep.subr.mxu0 0.0
  %273 = vmatpush1.xpose.msra.mxu0 0.0
  %274 = vmatprep.subr.mxu0 0.0
  %275 = vmatpush1.xpose.msra.mxu0 0.0
  %276 = vmatprep.subr.mxu0 0.0
  %277 = vmatpush1.xpose.msra.mxu0 0.0
  %278 = vmatprep.subr.mxu0 0.0
  %279 = vmatpush1.xpose.msra.mxu0 0.0
  %280 = vmatprep.subr.mxu0 0.0
  %281 = vmatpush1.xpose.msra.mxu0 0.0
  %282 = vmatprep.subr.mxu0 0.0
  %283 = vmatpush1.xpose.msra.mxu0 0.0
  %284 = vmatprep.subr.mxu0 0.0
  %285 = vmatpush1.xpose.msra.mxu0 0.0
  %286 = vmatprep.mubr.f32.mxu0 0.0
  %287 = vmatmul.mubr.f32.gmra.mrb[0].mxu0 %v214
  %v288 = vpop.f32.mrb[0].mxu0
  %v289 = vadd.f32 %v205, %v288
  %v290 = vpop.f32.mrb[0].mxu0
  %291 = vmatprep.mubr.f32.mxu0 0.0
  %292 = vmatmul.mubr.f32.gmra.mrb[0].mxu0 %v216
  %v293 = vpop.f32.mrb[0].mxu0
  %v294 = vadd.f32 %v206, %v293
  %v295 = vpop.f32.mrb[0].mxu0
  %296 = vdwg.mxu0
  %v297 = vsel %vm213, %v289, -inf
  %298 = vmax.xlane.f32.xlu0 %v297
  %v299 = vpop.xlane.xlu0 %298
  %v300 = vsel %vm213, %v294, -inf
  %301 = vmax.xlane.f32.xlu0 %v300
  %v302 = vpop.xlane.xlu0 %301
  %v303 = vsub.f32 %v289, %v299
  %v304 = vsub.f32 %v294, %v302
  %v305 = vmul.f32 %v303, 1.442695
  %v306 = vpow.pop %v305
  %v307 = vmul.f32 %v304, 1.442695
  %v308 = vpow.pop %v307
  %v309 = vsel %vm213, %v306, 0.0
  %310 = vadd.xlane.f32.xlu0 %v309
  %v311 = vpop.xlane.xlu0 %310
  %v312 = vsel %vm213, %v308, 0.0
  %313 = vadd.xlane.f32.xlu0 %v312
  %v314 = vpop.xlane.xlu0 %313
  %v315 = vrcp.pop %v311
  %v316 = vrcp.pop %v314
  %v317 = vmul.f32 %v306, %v315
  %v318 = vmul.f32 %v308, %v316
  %319 = vrot.lane.b32.xlu0 %v197, 64
  %v320 = vpop.permute.xlu0 %319
  %321 = vrot.lane.b32.xlu0 %v202, 64
  %v322 = vpop.permute.xlu0 %321
  %v326 = vsel %vm213, %v317, 0
  %v329 = vsel %vm213, %v318, 0
  %331 = vmatprep.subr.mxu0 0.0
  %332 = vmatpush1.msra.mxu0 %v320
  %333 = vmatprep.subr.mxu0 0.0
  %334 = vmatpush1.msra.mxu0 %v322
  %335 = vmatprep.subr.mxu0 0.0
  %336 = vmatpush1.msra.mxu0 0.0
  %337 = vmatprep.subr.mxu0 0.0
  %338 = vmatpush1.msra.mxu0 0.0
  %339 = vmatprep.subr.mxu0 0.0
  %340 = vmatpush1.msra.mxu0 0.0
  %341 = vmatprep.subr.mxu0 0.0
  %342 = vmatpush1.msra.mxu0 0.0
  %343 = vmatprep.subr.mxu0 0.0
  %344 = vmatpush1.msra.mxu0 0.0
  %345 = vmatprep.subr.mxu0 0.0
  %346 = vmatpush1.msra.mxu0 0.0
  %347 = vmatprep.subr.mxu0 0.0
  %348 = vmatpush1.msra.mxu0 0.0
  %349 = vmatprep.subr.mxu0 0.0
  %350 = vmatpush1.msra.mxu0 0.0
  %351 = vmatprep.subr.mxu0 0.0
  %352 = vmatpush1.msra.mxu0 0.0
  %353 = vmatprep.subr.mxu0 0.0
  %354 = vmatpush1.msra.mxu0 0.0
  %355 = vmatprep.subr.mxu0 0.0
  %356 = vmatpush1.msra.mxu0 0.0
  %357 = vmatprep.subr.mxu0 0.0
  %358 = vmatpush1.msra.mxu0 0.0
  %359 = vmatprep.subr.mxu0 0.0
  %360 = vmatpush1.msra.mxu0 0.0
  %361 = vmatprep.subr.mxu0 0.0
  %362 = vmatpush1.msra.mxu0 0.0
  %363 = vmatprep.subr.mxu0 0.0
  %364 = vmatpush1.msra.mxu0 0.0
  %365 = vmatprep.subr.mxu0 0.0
  %366 = vmatpush1.msra.mxu0 0.0
  %367 = vmatprep.subr.mxu0 0.0
  %368 = vmatpush1.msra.mxu0 0.0
  %369 = vmatprep.subr.mxu0 0.0
  %370 = vmatpush1.msra.mxu0 0.0
  %371 = vmatprep.subr.mxu0 0.0
  %372 = vmatpush1.msra.mxu0 0.0
  %373 = vmatprep.subr.mxu0 0.0
  %374 = vmatpush1.msra.mxu0 0.0
  %375 = vmatprep.subr.mxu0 0.0
  %376 = vmatpush1.msra.mxu0 0.0
  %377 = vmatprep.subr.mxu0 0.0
  %378 = vmatpush1.msra.mxu0 0.0
  %379 = vmatprep.subr.mxu0 0.0
  %380 = vmatpush1.msra.mxu0 0.0
  %381 = vmatprep.subr.mxu0 0.0
  %382 = vmatpush1.msra.mxu0 0.0
  %383 = vmatprep.subr.mxu0 0.0
  %384 = vmatpush1.msra.mxu0 0.0
  %385 = vmatprep.subr.mxu0 0.0
  %386 = vmatpush1.msra.mxu0 0.0
  %387 = vmatprep.subr.mxu0 0.0
  %388 = vmatpush1.msra.mxu0 0.0
  %389 = vmatprep.subr.mxu0 0.0
  %390 = vmatpush1.msra.mxu0 0.0
  %391 = vmatprep.subr.mxu0 0.0
  %392 = vmatpush1.msra.mxu0 0.0
  %393 = vmatprep.subr.mxu0 0.0
  %394 = vmatpush1.msra.mxu0 0.0
  %395 = vmatprep.mubr.f32.mxu0 0.0
  %396 = vmatmul.mubr.f32.gmra.mrb[0].mxu0 %v326
  %v397 = vpop.f32.mrb[0].mxu0
  %v398 = vadd.f32 0.0, %v397
  %v399 = vpop.f32.mrb[0].mxu0
  %400 = vmatprep.mubr.f32.mxu0 0.0
  %401 = vmatmul.mubr.f32.gmra.mrb[0].mxu0 %v329
  %v402 = vpop.f32.mrb[0].mxu0
  %v403 = vadd.f32 0.0, %v402
  %v404 = vpop.f32.mrb[0].mxu0
  %405 = vdwg.mxu0
  %406 = vrot.lane.b32.xlu0 %v197, 112
  %v407 = vpop.permute.xlu0 %406
  %408 = vrot.lane.b32.xlu0 %v202, 112
  %v409 = vpop.permute.xlu0 %408
  %410 = vrot.lane.b32.xlu0 %v197, 80
  %v411 = vpop.permute.xlu0 %410
  %412 = vrot.lane.b32.xlu0 %v202, 80
  %v413 = vpop.permute.xlu0 %412
  %v414 = vsel %vm213, %v407, 0
  %v416 = vsel %vm213, %v409, 0
  %v418 = vsel %vm213, %v411, 0
  %v420 = vsel %vm213, %v413, 0
  %422 = vmatprep.subr.mxu0 0.0
  %423 = vmatpush1.xpose.msra.mxu0 %v418
  %424 = vmatprep.subr.mxu0 0.0
  %425 = vmatpush1.xpose.msra.mxu0 %v420
  %426 = vmatprep.subr.mxu0 0.0
  %427 = vmatpush1.xpose.msra.mxu0 0.0
  %428 = vmatprep.subr.mxu0 0.0
  %429 = vmatpush1.xpose.msra.mxu0 0.0
  %430 = vmatprep.subr.mxu0 0.0
  %431 = vmatpush1.xpose.msra.mxu0 0.0
  %432 = vmatprep.subr.mxu0 0.0
  %433 = vmatpush1.xpose.msra.mxu0 0.0
  %434 = vmatprep.subr.mxu0 0.0
  %435 = vmatpush1.xpose.msra.mxu0 0.0
  %436 = vmatprep.subr.mxu0 0.0
  %437 = vmatpush1.xpose.msra.mxu0 0.0
  %438 = vmatprep.subr.mxu0 0.0
  %439 = vmatpush1.xpose.msra.mxu0 0.0
  %440 = vmatprep.subr.mxu0 0.0
  %441 = vmatpush1.xpose.msra.mxu0 0.0
  %442 = vmatprep.subr.mxu0 0.0
  %443 = vmatpush1.xpose.msra.mxu0 0.0
  %444 = vmatprep.subr.mxu0 0.0
  %445 = vmatpush1.xpose.msra.mxu0 0.0
  %446 = vmatprep.subr.mxu0 0.0
  %447 = vmatpush1.xpose.msra.mxu0 0.0
  %448 = vmatprep.subr.mxu0 0.0
  %449 = vmatpush1.xpose.msra.mxu0 0.0
  %450 = vmatprep.subr.mxu0 0.0
  %451 = vmatpush1.xpose.msra.mxu0 0.0
  %452 = vmatprep.subr.mxu0 0.0
  %453 = vmatpush1.xpose.msra.mxu0 0.0
  %454 = vmatprep.subr.mxu0 0.0
  %455 = vmatpush1.xpose.msra.mxu0 0.0
  %456 = vmatprep.subr.mxu0 0.0
  %457 = vmatpush1.xpose.msra.mxu0 0.0
  %458 = vmatprep.subr.mxu0 0.0
  %459 = vmatpush1.xpose.msra.mxu0 0.0
  %460 = vmatprep.subr.mxu0 0.0
  %461 = vmatpush1.xpose.msra.mxu0 0.0
  %462 = vmatprep.subr.mxu0 0.0
  %463 = vmatpush1.xpose.msra.mxu0 0.0
  %464 = vmatprep.subr.mxu0 0.0
  %465 = vmatpush1.xpose.msra.mxu0 0.0
  %466 = vmatprep.subr.mxu0 0.0
  %467 = vmatpush1.xpose.msra.mxu0 0.0
  %468 = vmatprep.subr.mxu0 0.0
  %469 = vmatpush1.xpose.msra.mxu0 0.0
  %470 = vmatprep.subr.mxu0 0.0
  %471 = vmatpush1.xpose.msra.mxu0 0.0
  %472 = vmatprep.subr.mxu0 0.0
  %473 = vmatpush1.xpose.msra.mxu0 0.0
  %474 = vmatprep.subr.mxu0 0.0
  %475 = vmatpush1.xpose.msra.mxu0 0.0
  %476 = vmatprep.subr.mxu0 0.0
  %477 = vmatpush1.xpose.msra.mxu0 0.0
  %478 = vmatprep.subr.mxu0 0.0
  %479 = vmatpush1.xpose.msra.mxu0 0.0
  %480 = vmatprep.subr.mxu0 0.0
  %481 = vmatpush1.xpose.msra.mxu0 0.0
  %482 = vmatprep.subr.mxu0 0.0
  %483 = vmatpush1.xpose.msra.mxu0 0.0
  %484 = vmatprep.subr.mxu0 0.0
  %485 = vmatpush1.xpose.msra.mxu0 0.0
  %486 = vmatprep.mubr.f32.mxu0 0.0
  %487 = vmatmul.mubr.f32.gmra.mrb[0].mxu0 %v414
  %v488 = vpop.f32.mrb[0].mxu0
  %v489 = vadd.f32 %v205, %v488
  %v490 = vpop.f32.mrb[0].mxu0
  %491 = vmatprep.mubr.f32.mxu0 0.0
  %492 = vmatmul.mubr.f32.gmra.mrb[0].mxu0 %v416
  %v493 = vpop.f32.mrb[0].mxu0
  %v494 = vadd.f32 %v206, %v493
  %v495 = vpop.f32.mrb[0].mxu0
  %496 = vdwg.mxu0
  %v497 = vsel %vm213, %v489, -inf
  %498 = vmax.xlane.f32.xlu0 %v497
  %v499 = vpop.xlane.xlu0 %498
  %v500 = vsel %vm213, %v494, -inf
  %501 = vmax.xlane.f32.xlu0 %v500
  %v502 = vpop.xlane.xlu0 %501
  %v503 = vsub.f32 %v489, %v499
  %v504 = vsub.f32 %v494, %v502
  %v505 = vmul.f32 %v503, 1.442695
  %v506 = vpow.pop %v505
  %v507 = vmul.f32 %v504, 1.442695
  %v508 = vpow.pop %v507
  %v509 = vsel %vm213, %v506, 0.0
  %510 = vadd.xlane.f32.xlu0 %v509
  %v511 = vpop.xlane.xlu0 %510
  %v512 = vsel %vm213, %v508, 0.0
  %513 = vadd.xlane.f32.xlu0 %v512
  %v514 = vpop.xlane.xlu0 %513
  %v515 = vrcp.pop %v511
  %v516 = vrcp.pop %v514
  %v517 = vmul.f32 %v506, %v515
  %v518 = vmul.f32 %v508, %v516
  %519 = vrot.lane.b32.xlu0 %v197, 48
  %v520 = vpop.permute.xlu0 %519
  %521 = vrot.lane.b32.xlu0 %v202, 48
  %v522 = vpop.permute.xlu0 %521
  %v526 = vsel %vm213, %v517, 0
  %v529 = vsel %vm213, %v518, 0
  %531 = vmatprep.subr.mxu0 0.0
  %532 = vmatpush1.msra.mxu0 %v520
  %533 = vmatprep.subr.mxu0 0.0
  %534 = vmatpush1.msra.mxu0 %v522
  %535 = vmatprep.subr.mxu0 0.0
  %536 = vmatpush1.msra.mxu0 0.0
  %537 = vmatprep.subr.mxu0 0.0
  %538 = vmatpush1.msra.mxu0 0.0
  %539 = vmatprep.subr.mxu0 0.0
  %540 = vmatpush1.msra.mxu0 0.0
  %541 = vmatprep.subr.mxu0 0.0
  %542 = vmatpush1.msra.mxu0 0.0
  %543 = vmatprep.subr.mxu0 0.0
  %544 = vmatpush1.msra.mxu0 0.0
  %545 = vmatprep.subr.mxu0 0.0
  %546 = vmatpush1.msra.mxu0 0.0
  %547 = vmatprep.subr.mxu0 0.0
  %548 = vmatpush1.msra.mxu0 0.0
  %549 = vmatprep.subr.mxu0 0.0
  %550 = vmatpush1.msra.mxu0 0.0
  %551 = vmatprep.subr.mxu0 0.0
  %552 = vmatpush1.msra.mxu0 0.0
  %553 = vmatprep.subr.mxu0 0.0
  %554 = vmatpush1.msra.mxu0 0.0
  %555 = vmatprep.subr.mxu0 0.0
  %556 = vmatpush1.msra.mxu0 0.0
  %557 = vmatprep.subr.mxu0 0.0
  %558 = vmatpush1.msra.mxu0 0.0
  %559 = vmatprep.subr.mxu0 0.0
  %560 = vmatpush1.msra.mxu0 0.0
  %561 = vmatprep.subr.mxu0 0.0
  %562 = vmatpush1.msra.mxu0 0.0
  %563 = vmatprep.subr.mxu0 0.0
  %564 = vmatpush1.msra.mxu0 0.0
  %565 = vmatprep.subr.mxu0 0.0
  %566 = vmatpush1.msra.mxu0 0.0
  %567 = vmatprep.subr.mxu0 0.0
  %568 = vmatpush1.msra.mxu0 0.0
  %569 = vmatprep.subr.mxu0 0.0
  %570 = vmatpush1.msra.mxu0 0.0
  %571 = vmatprep.subr.mxu0 0.0
  %572 = vmatpush1.msra.mxu0 0.0
  %573 = vmatprep.subr.mxu0 0.0
  %574 = vmatpush1.msra.mxu0 0.0
  %575 = vmatprep.subr.mxu0 0.0
  %576 = vmatpush1.msra.mxu0 0.0
  %577 = vmatprep.subr.mxu0 0.0
  %578 = vmatpush1.msra.mxu0 0.0
  %579 = vmatprep.subr.mxu0 0.0
  %580 = vmatpush1.msra.mxu0 0.0
  %581 = vmatprep.subr.mxu0 0.0
  %582 = vmatpush1.msra.mxu0 0.0
  %583 = vmatprep.subr.mxu0 0.0
  %584 = vmatpush1.msra.mxu0 0.0
  %585 = vmatprep.subr.mxu0 0.0
  %586 = vmatpush1.msra.mxu0 0.0
  %587 = vmatprep.subr.mxu0 0.0
  %588 = vmatpush1.msra.mxu0 0.0
  %589 = vmatprep.subr.mxu0 0.0
  %590 = vmatpush1.msra.mxu0 0.0
  %591 = vmatprep.subr.mxu0 0.0
  %592 = vmatpush1.msra.mxu0 0.0
  %593 = vmatprep.subr.mxu0 0.0
  %594 = vmatpush1.msra.mxu0 0.0
  %595 = vmatprep.mubr.f32.mxu0 0.0
  %596 = vmatmul.mubr.f32.gmra.mrb[0].mxu0 %v526
  %v597 = vpop.f32.mrb[0].mxu0
  %v598 = vadd.f32 0.0, %v597
  %v599 = vpop.f32.mrb[0].mxu0
  %600 = vmatprep.mubr.f32.mxu0 0.0
  %601 = vmatmul.mubr.f32.gmra.mrb[0].mxu0 %v529
  %v602 = vpop.f32.mrb[0].mxu0
  %v603 = vadd.f32 0.0, %v602
  %v604 = vpop.f32.mrb[0].mxu0
  %605 = vdwg.mxu0
  %608 = vrot.lane.b32.xlu0 %v598, 16
  %v609 = vpop.permute.xlu0 %608
  %610 = vrot.lane.b32.xlu0 %v603, 16
  %v611 = vpop.permute.xlu0 %610
  %v614 = vsel %vm213, %v398, %v609
  %v615 = vsel %vm213, %v403, %v611
  %v616 = vld [vmem:[%s6] sm:$0xff]
  %v617 = vld [vmem:[%s6 + $0x8] sm:$0xff]
  %v618 = vld [vmem:[%s6 + $0x10] sm:$0xff]
  %v619 = vld [vmem:[%s6 + $0x18] sm:$0xff]
  %v620 = vld [vmem:[%s7] sm:$0x1]
  %v622 = vlaneseq
  %v623 = vshrl.u32 %v622, 7
  %v624 = vsub.s32 0, %v623
  %v625 = vrot.slane %v620, %v624
  %v628 = vsel %vm69, %v614, 0
  %v631 = vsel %vm69, %v615, 0
  %633 = vmatprep.subr.mxu0 0.0
  %634 = vmatpush1.msra.mxu0 %v616
  %635 = vmatprep.subr.mxu0 0.0
  %636 = vmatpush1.msra.mxu0 %v617
  %637 = vmatprep.subr.mxu0 0.0
  %638 = vmatpush1.msra.mxu0 %v618
  %639 = vmatprep.subr.mxu0 0.0
  %640 = vmatpush1.msra.mxu0 %v619
  %641 = vmatprep.subr.mxu0 0.0
  %642 = vmatpush1.msra.mxu0 0.0
  %643 = vmatprep.subr.mxu0 0.0
  %644 = vmatpush1.msra.mxu0 0.0
  %645 = vmatprep.subr.mxu0 0.0
  %646 = vmatpush1.msra.mxu0 0.0
  %647 = vmatprep.subr.mxu0 0.0
  %648 = vmatpush1.msra.mxu0 0.0
  %649 = vmatprep.subr.mxu0 0.0
  %650 = vmatpush1.msra.mxu0 0.0
  %651 = vmatprep.subr.mxu0 0.0
  %652 = vmatpush1.msra.mxu0 0.0
  %653 = vmatprep.subr.mxu0 0.0
  %654 = vmatpush1.msra.mxu0 0.0
  %655 = vmatprep.subr.mxu0 0.0
  %656 = vmatpush1.msra.mxu0 0.0
  %657 = vmatprep.subr.mxu0 0.0
  %658 = vmatpush1.msra.mxu0 0.0
  %659 = vmatprep.subr.mxu0 0.0
  %660 = vmatpush1.msra.mxu0 0.0
  %661 = vmatprep.subr.mxu0 0.0
  %662 = vmatpush1.msra.mxu0 0.0
  %663 = vmatprep.subr.mxu0 0.0
  %664 = vmatpush1.msra.mxu0 0.0
  %665 = vmatprep.subr.mxu0 0.0
  %666 = vmatpush1.msra.mxu0 0.0
  %667 = vmatprep.subr.mxu0 0.0
  %668 = vmatpush1.msra.mxu0 0.0
  %669 = vmatprep.subr.mxu0 0.0
  %670 = vmatpush1.msra.mxu0 0.0
  %671 = vmatprep.subr.mxu0 0.0
  %672 = vmatpush1.msra.mxu0 0.0
  %673 = vmatprep.subr.mxu0 0.0
  %674 = vmatpush1.msra.mxu0 0.0
  %675 = vmatprep.subr.mxu0 0.0
  %676 = vmatpush1.msra.mxu0 0.0
  %677 = vmatprep.subr.mxu0 0.0
  %678 = vmatpush1.msra.mxu0 0.0
  %679 = vmatprep.subr.mxu0 0.0
  %680 = vmatpush1.msra.mxu0 0.0
  %681 = vmatprep.subr.mxu0 0.0
  %682 = vmatpush1.msra.mxu0 0.0
  %683 = vmatprep.subr.mxu0 0.0
  %684 = vmatpush1.msra.mxu0 0.0
  %685 = vmatprep.subr.mxu0 0.0
  %686 = vmatpush1.msra.mxu0 0.0
  %687 = vmatprep.subr.mxu0 0.0
  %688 = vmatpush1.msra.mxu0 0.0
  %689 = vmatprep.subr.mxu0 0.0
  %690 = vmatpush1.msra.mxu0 0.0
  %691 = vmatprep.subr.mxu0 0.0
  %692 = vmatpush1.msra.mxu0 0.0
  %693 = vmatprep.subr.mxu0 0.0
  %694 = vmatpush1.msra.mxu0 0.0
  %695 = vmatprep.subr.mxu0 0.0
  %696 = vmatpush1.msra.mxu0 0.0
  %697 = vmatprep.mubr.f32.mxu0 0.0
  %698 = vmatmul.mubr.f32.gmra.mrb[0].mxu0 %v628
  %v699 = vpop.f32.mrb[0].mxu0
  %v700 = vadd.f32 %v625, %v699
  %v701 = vpop.f32.mrb[0].mxu0
  %702 = vmatprep.mubr.f32.mxu0 0.0
  %703 = vmatmul.mubr.f32.gmra.mrb[0].mxu0 %v631
  %v704 = vpop.f32.mrb[0].mxu0
  %v705 = vadd.f32 %v625, %v704
  %v706 = vpop.f32.mrb[0].mxu0
  %707 = vdwg.mxu0
  %v708 = vadd.f32 %v111, %v700
  %v709 = vadd.f32 %v112, %v705
  %v710 = vld [vmem:[%s8] sm:$0x1]
  %v711 = vld [vmem:[%s9] sm:$0x1]
  %v712 = vsel %vm69, %v708, 0.0
  %713 = vadd.xlane.f32.xlu0 %v712
  %v714 = vpop.xlane.xlu0 %713
  %v715 = vsel %vm69, %v709, 0.0
  %716 = vadd.xlane.f32.xlu0 %v715
  %v717 = vpop.xlane.xlu0 %716
  %v718 = vmul.f32 %v714, %v76
  %v719 = vmul.f32 %v717, %v76
  %v720 = vsub.f32 %v708, %v718
  %v721 = vsub.f32 %v709, %v719
  %v722 = vmul.f32 %v720, %v720
  %v723 = vmul.f32 %v721, %v721
  %v724 = vsel %vm69, %v722, 0.0
  %725 = vadd.xlane.f32.xlu0 %v724
  %v726 = vpop.xlane.xlu0 %725
  %v727 = vsel %vm69, %v723, 0.0
  %728 = vadd.xlane.f32.xlu0 %v727
  %v729 = vpop.xlane.xlu0 %728
  %v730 = vmul.f32 %v726, %v76
  %v731 = vmul.f32 %v729, %v76
  %v732 = vadd.f32 %v730, 1e-12
  %v733 = vadd.f32 %v731, 1e-12
  %v734 = vrsqrt.pop %v732
  %v735 = vrsqrt.pop %v733
  %v736 = vmul.f32 %v720, %v734
  %v737 = vmul.f32 %v721, %v735
  %v739 = vlaneseq
  %v740 = vshrl.u32 %v739, 7
  %v741 = vsub.s32 0, %v740
  %v742 = vrot.slane %v710, %v741
  %v744 = vmul.f32 %v736, %v742
  %v745 = vmul.f32 %v737, %v742
  %v747 = vlaneseq
  %v748 = vshrl.u32 %v747, 7
  %v749 = vsub.s32 0, %v748
  %v750 = vrot.slane %v711, %v749
  %v752 = vadd.f32 %v744, %v750
  %v753 = vadd.f32 %v745, %v750
  %v754 = vld [vmem:[%s10] sm:$0xff]
  %v755 = vld [vmem:[%s10 + $0x8] sm:$0xff]
  %v756 = vld [vmem:[%s10 + $0x10] sm:$0xff]
  %v757 = vld [vmem:[%s10 + $0x18] sm:$0xff]
  %v758 = vld [vmem:[%s11] sm:$0x1]
  %v760 = vlaneseq
  %v761 = vshrl.u32 %v760, 7
  %v762 = vsub.s32 0, %v761
  %v763 = vrot.slane %v758, %v762
  %v766 = vsel %vm69, %v752, 0
  %v769 = vsel %vm69, %v753, 0
  %771 = vmatprep.subr.mxu0 0.0
  %772 = vmatpush1.msra.mxu0 %v754
  %773 = vmatprep.subr.mxu0 0.0
  %774 = vmatpush1.msra.mxu0 %v755
  %775 = vmatprep.subr.mxu0 0.0
  %776 = vmatpush1.msra.mxu0 %v756
  %777 = vmatprep.subr.mxu0 0.0
  %778 = vmatpush1.msra.mxu0 %v757
  %779 = vmatprep.subr.mxu0 0.0
  %780 = vmatpush1.msra.mxu0 0.0
  %781 = vmatprep.subr.mxu0 0.0
  %782 = vmatpush1.msra.mxu0 0.0
  %783 = vmatprep.subr.mxu0 0.0
  %784 = vmatpush1.msra.mxu0 0.0
  %785 = vmatprep.subr.mxu0 0.0
  %786 = vmatpush1.msra.mxu0 0.0
  %787 = vmatprep.subr.mxu0 0.0
  %788 = vmatpush1.msra.mxu0 0.0
  %789 = vmatprep.subr.mxu0 0.0
  %790 = vmatpush1.msra.mxu0 0.0
  %791 = vmatprep.subr.mxu0 0.0
  %792 = vmatpush1.msra.mxu0 0.0
  %793 = vmatprep.subr.mxu0 0.0
  %794 = vmatpush1.msra.mxu0 0.0
  %795 = vmatprep.subr.mxu0 0.0
  %796 = vmatpush1.msra.mxu0 0.0
  %797 = vmatprep.subr.mxu0 0.0
  %798 = vmatpush1.msra.mxu0 0.0
  %799 = vmatprep.subr.mxu0 0.0
  %800 = vmatpush1.msra.mxu0 0.0
  %801 = vmatprep.subr.mxu0 0.0
  %802 = vmatpush1.msra.mxu0 0.0
  %803 = vmatprep.subr.mxu0 0.0
  %804 = vmatpush1.msra.mxu0 0.0
  %805 = vmatprep.subr.mxu0 0.0
  %806 = vmatpush1.msra.mxu0 0.0
  %807 = vmatprep.subr.mxu0 0.0
  %808 = vmatpush1.msra.mxu0 0.0
  %809 = vmatprep.subr.mxu0 0.0
  %810 = vmatpush1.msra.mxu0 0.0
  %811 = vmatprep.subr.mxu0 0.0
  %812 = vmatpush1.msra.mxu0 0.0
  %813 = vmatprep.subr.mxu0 0.0
  %814 = vmatpush1.msra.mxu0 0.0
  %815 = vmatprep.subr.mxu0 0.0
  %816 = vmatpush1.msra.mxu0 0.0
  %817 = vmatprep.subr.mxu0 0.0
  %818 = vmatpush1.msra.mxu0 0.0
  %819 = vmatprep.subr.mxu0 0.0
  %820 = vmatpush1.msra.mxu0 0.0
  %821 = vmatprep.subr.mxu0 0.0
  %822 = vmatpush1.msra.mxu0 0.0
  %823 = vmatprep.subr.mxu0 0.0
  %824 = vmatpush1.msra.mxu0 0.0
  %825 = vmatprep.subr.mxu0 0.0
  %826 = vmatpush1.msra.mxu0 0.0
  %827 = vmatprep.subr.mxu0 0.0
  %828 = vmatpush1.msra.mxu0 0.0
  %829 = vmatprep.subr.mxu0 0.0
  %830 = vmatpush1.msra.mxu0 0.0
  %831 = vmatprep.subr.mxu0 0.0
  %832 = vmatpush1.msra.mxu0 0.0
  %833 = vmatprep.subr.mxu0 0.0
  %834 = vmatpush1.msra.mxu0 0.0
  %835 = vmatprep.mubr.f32.mxu0 0.0
  %836 = vmatmul.mubr.f32.gmra.mrb[0].mxu0 %v766
  %v837 = vpop.f32.mrb[0].mxu0
  %v838 = vadd.f32 %v763, %v837
  %v839 = vpop.f32.mrb[0].mxu0
  %840 = vmatprep.mubr.f32.mxu0 0.0
  %841 = vmatmul.mubr.f32.gmra.mrb[0].mxu0 %v769
  %v842 = vpop.f32.mrb[0].mxu0
  %v843 = vadd.f32 %v763, %v842
  %v844 = vpop.f32.mrb[0].mxu0
  %845 = vdwg.mxu0
  %v846 = vmul.f32 %v838, %v838
  %v847 = vmul.f32 %v843, %v843
  %v848 = vmul.f32 %v838, %v846
  %v849 = vmul.f32 %v843, %v847
  %v850 = vmul.f32 %v848, 0.044715
  %v851 = vmul.f32 %v849, 0.044715
  %v852 = vadd.f32 %v838, %v850
  %v853 = vadd.f32 %v843, %v851
  %v854 = vmul.f32 %v852, 0.7978846
  %v855 = vmul.f32 %v853, 0.7978846
  %v856 = vtanh.pop %v854
  %v857 = vtanh.pop %v855
  %v858 = vadd.f32 %v856, 1.0
  %v859 = vadd.f32 %v857, 1.0
  %v860 = vmul.f32 %v858, 0.5
  %v861 = vmul.f32 %v859, 0.5
  %v862 = vmul.f32 %v838, %v860
  %v863 = vmul.f32 %v843, %v861
  %v864 = vld [vmem:[%s12] sm:$0xff]
  %v865 = vld [vmem:[%s12 + $0x8] sm:$0xff]
  %v866 = vld [vmem:[%s12 + $0x10] sm:$0xff]
  %v867 = vld [vmem:[%s12 + $0x18] sm:$0xff]
  %v868 = vld [vmem:[%s12 + $0x20] sm:$0xff]
  %v869 = vld [vmem:[%s12 + $0x28] sm:$0xff]
  %v870 = vld [vmem:[%s12 + $0x30] sm:$0xff]
  %v871 = vld [vmem:[%s12 + $0x38] sm:$0xff]
  %v872 = vld [vmem:[%s13] sm:$0x1]
  %v874 = vlaneseq
  %v875 = vshrl.u32 %v874, 7
  %v876 = vsub.s32 0, %v875
  %v877 = vrot.slane %v872, %v876
  %vm879 = vcmask 523264
  %v881 = vsel %vm879, %v862, 0
  %v884 = vsel %vm879, %v863, 0
  %886 = vmatprep.subr.mxu0 0.0
  %887 = vmatpush1.msra.mxu0 %v864
  %888 = vmatprep.subr.mxu0 0.0
  %889 = vmatpush1.msra.mxu0 %v865
  %890 = vmatprep.subr.mxu0 0.0
  %891 = vmatpush1.msra.mxu0 %v866
  %892 = vmatprep.subr.mxu0 0.0
  %893 = vmatpush1.msra.mxu0 %v867
  %894 = vmatprep.subr.mxu0 0.0
  %895 = vmatpush1.msra.mxu0 %v868
  %896 = vmatprep.subr.mxu0 0.0
  %897 = vmatpush1.msra.mxu0 %v869
  %898 = vmatprep.subr.mxu0 0.0
  %899 = vmatpush1.msra.mxu0 %v870
  %900 = vmatprep.subr.mxu0 0.0
  %901 = vmatpush1.msra.mxu0 %v871
  %902 = vmatprep.subr.mxu0 0.0
  %903 = vmatpush1.msra.mxu0 0.0
  %904 = vmatprep.subr.mxu0 0.0
  %905 = vmatpush1.msra.mxu0 0.0
  %906 = vmatprep.subr.mxu0 0.0
  %907 = vmatpush1.msra.mxu0 0.0
  %908 = vmatprep.subr.mxu0 0.0
  %909 = vmatpush1.msra.mxu0 0.0
  %910 = vmatprep.subr.mxu0 0.0
  %911 = vmatpush1.msra.mxu0 0.0
  %912 = vmatprep.subr.mxu0 0.0
  %913 = vmatpush1.msra.mxu0 0.0
  %914 = vmatprep.subr.mxu0 0.0
  %915 = vmatpush1.msra.mxu0 0.0
  %916 = vmatprep.subr.mxu0 0.0
  %917 = vmatpush1.msra.mxu0 0.0
  %918 = vmatprep.subr.mxu0 0.0
  %919 = vmatpush1.msra.mxu0 0.0
  %920 = vmatprep.subr.mxu0 0.0
  %921 = vmatpush1.msra.mxu0 0.0
  %922 = vmatprep.subr.mxu0 0.0
  %923 = vmatpush1.msra.mxu0 0.0
  %924 = vmatprep.subr.mxu0 0.0
  %925 = vmatpush1.msra.mxu0 0.0
  %926 = vmatprep.subr.mxu0 0.0
  %927 = vmatpush1.msra.mxu0 0.0
  %928 = vmatprep.subr.mxu0 0.0
  %929 = vmatpush1.msra.mxu0 0.0
  %930 = vmatprep.subr.mxu0 0.0
  %931 = vmatpush1.msra.mxu0 0.0
  %932 = vmatprep.subr.mxu0 0.0
  %933 = vmatpush1.msra.mxu0 0.0
  %934 = vmatprep.subr.mxu0 0.0
  %935 = vmatpush1.msra.mxu0 0.0
  %936 = vmatprep.subr.mxu0 0.0
  %937 = vmatpush1.msra.mxu0 0.0
  %938 = vmatprep.subr.mxu0 0.0
  %939 = vmatpush1.msra.mxu0 0.0
  %940 = vmatprep.subr.mxu0 0.0
  %941 = vmatpush1.msra.mxu0 0.0
  %942 = vmatprep.subr.mxu0 0.0
  %943 = vmatpush1.msra.mxu0 0.0
  %944 = vmatprep.subr.mxu0 0.0
  %945 = vmatpush1.msra.mxu0 0.0
  %946 = vmatprep.subr.mxu0 0.0
  %947 = vmatpush1.msra.mxu0 0.0
  %948 = vmatprep.subr.mxu0 0.0
  %949 = vmatpush1.msra.mxu0 0.0
  %950 = vmatprep.mubr.f32.mxu0 0.0
  %951 = vmatmul.mubr.f32.gmra.mrb[0].mxu0 %v881
  %v952 = vpop.f32.mrb[0].mxu0
  %v953 = vadd.f32 %v877, %v952
  %v954 = vpop.f32.mrb[0].mxu0
  %955 = vmatprep.mubr.f32.mxu0 0.0
  %956 = vmatmul.mubr.f32.gmra.mrb[0].mxu0 %v884
  %v957 = vpop.f32.mrb[0].mxu0
  %v958 = vadd.f32 %v877, %v957
  %v959 = vpop.f32.mrb[0].mxu0
  %960 = vdwg.mxu0
  %v961 = vadd.f32 %v752, %v953
  %v962 = vadd.f32 %v753, %v958
  %v963 = vld [vmem:[%s14] sm:$0x1]
  %v964 = vld [vmem:[%s15] sm:$0x1]
  %v965 = vsel %vm69, %v961, 0.0
  %966 = vadd.xlane.f32.xlu0 %v965
  %v967 = vpop.xlane.xlu0 %966
  %v968 = vsel %vm69, %v962, 0.0
  %969 = vadd.xlane.f32.xlu0 %v968
  %v970 = vpop.xlane.xlu0 %969
  %v971 = vmul.f32 %v967, %v76
  %v972 = vmul.f32 %v970, %v76
  %v973 = vsub.f32 %v961, %v971
  %v974 = vsub.f32 %v962, %v972
  %v975 = vmul.f32 %v973, %v973
  %v976 = vmul.f32 %v974, %v974
  %v977 = vsel %vm69, %v975, 0.0
  %978 = vadd.xlane.f32.xlu0 %v977
  %v979 = vpop.xlane.xlu0 %978
  %v980 = vsel %vm69, %v976, 0.0
  %981 = vadd.xlane.f32.xlu0 %v980
  %v982 = vpop.xlane.xlu0 %981
  %v983 = vmul.f32 %v979, %v76
  %v984 = vmul.f32 %v982, %v76
  %v985 = vadd.f32 %v983, 1e-12
  %v986 = vadd.f32 %v984, 1e-12
  %v987 = vrsqrt.pop %v985
  %v988 = vrsqrt.pop %v986
  %v989 = vmul.f32 %v973, %v987
  %v990 = vmul.f32 %v974, %v988
  %v992 = vlaneseq
  %v993 = vshrl.u32 %v992, 7
  %v994 = vsub.s32 0, %v993
  %v995 = vrot.slane %v963, %v994
  %v997 = vmul.f32 %v989, %v995
  %v998 = vmul.f32 %v990, %v995
  %v1000 = vlaneseq
  %v1001 = vshrl.u32 %v1000, 7
  %v1002 = vsub.s32 0, %v1001
  %v1003 = vrot.slane %v964, %v1002
  %v1005 = vadd.f32 %v997, %v1003
  %v1006 = vadd.f32 %v998, %v1003
  %v1007 = vld [vmem:[%s16] sm:$0xff]
  %v1008 = vld [vmem:[%s16 + $0x8] sm:$0xff]
  %v1009 = vld [vmem:[%s16 + $0x10] sm:$0xff]
  %v1010 = vld [vmem:[%s16 + $0x18] sm:$0xff]
  %v1011 = vld [vmem:[%s17] sm:$0x1]
  %v1013 = vlaneseq
  %v1014 = vshrl.u32 %v1013, 7
  %v1015 = vsub.s32 0, %v1014
  %v1016 = vrot.slane %v1011, %v1015
  %v1019 = vsel %vm69, %v1005, 0
  %v1022 = vsel %vm69, %v1006, 0
  %1024 = vmatprep.subr.mxu0 0.0
  %1025 = vmatpush1.msra.mxu0 %v1007
  %1026 = vmatprep.subr.mxu0 0.0
  %1027 = vmatpush1.msra.mxu0 %v1008
  %1028 = vmatprep.subr.mxu0 0.0
  %1029 = vmatpush1.msra.mxu0 %v1009
  %1030 = vmatprep.subr.mxu0 0.0
  %1031 = vmatpush1.msra.mxu0 %v1010
  %1032 = vmatprep.subr.mxu0 0.0
  %1033 = vmatpush1.msra.mxu0 0.0
  %1034 = vmatprep.subr.mxu0 0.0
  %1035 = vmatpush1.msra.mxu0 0.0
  %1036 = vmatprep.subr.mxu0 0.0
  %1037 = vmatpush1.msra.mxu0 0.0
  %1038 = vmatprep.subr.mxu0 0.0
  %1039 = vmatpush1.msra.mxu0 0.0
  %1040 = vmatprep.subr.mxu0 0.0
  %1041 = vmatpush1.msra.mxu0 0.0
  %1042 = vmatprep.subr.mxu0 0.0
  %1043 = vmatpush1.msra.mxu0 0.0
  %1044 = vmatprep.subr.mxu0 0.0
  %1045 = vmatpush1.msra.mxu0 0.0
  %1046 = vmatprep.subr.mxu0 0.0
  %1047 = vmatpush1.msra.mxu0 0.0
  %1048 = vmatprep.subr.mxu0 0.0
  %1049 = vmatpush1.msra.mxu0 0.0
  %1050 = vmatprep.subr.mxu0 0.0
  %1051 = vmatpush1.msra.mxu0 0.0
  %1052 = vmatprep.subr.mxu0 0.0
  %1053 = vmatpush1.msra.mxu0 0.0
  %1054 = vmatprep.subr.mxu0 0.0
  %1055 = vmatpush1.msra.mxu0 0.0
  %1056 = vmatprep.subr.mxu0 0.0
  %1057 = vmatpush1.msra.mxu0 0.0
  %1058 = vmatprep.subr.mxu0 0.0
  %1059 = vmatpush1.msra.mxu0 0.0
  %1060 = vmatprep.subr.mxu0 0.0
  %1061 = vmatpush1.msra.mxu0 0.0
  %1062 = vmatprep.subr.mxu0 0.0
  %1063 = vmatpush1.msra.mxu0 0.0
  %1064 = vmatprep.subr.mxu0 0.0
  %1065 = vmatpush1.msra.mxu0 0.0
  %1066 = vmatprep.subr.mxu0 0.0
  %1067 = vmatpush1.msra.mxu0 0.0
  %1068 = vmatprep.subr.mxu0 0.0
  %1069 = vmatpush1.msra.mxu0 0.0
  %1070 = vmatprep.subr.mxu0 0.0
  %1071 = vmatpush1.msra.mxu0 0.0
  %1072 = vmatprep.subr.mxu0 0.0
  %1073 = vmatpush1.msra.mxu0 0.0
  %1074 = vmatprep.subr.mxu0 0.0
  %1075 = vmatpush1.msra.mxu0 0.0
  %1076 = vmatprep.subr.mxu0 0.0
  %1077 = vmatpush1.msra.mxu0 0.0
  %1078 = vmatprep.subr.mxu0 0.0
  %1079 = vmatpush1.msra.mxu0 0.0
  %1080 = vmatprep.subr.mxu0 0.0
  %1081 = vmatpush1.msra.mxu0 0.0
  %1082 = vmatprep.subr.mxu0 0.0
  %1083 = vmatpush1.msra.mxu0 0.0
  %1084 = vmatprep.subr.mxu0 0.0
  %1085 = vmatpush1.msra.mxu0 0.0
  %1086 = vmatprep.subr.mxu0 0.0
  %1087 = vmatpush1.msra.mxu0 0.0
  %1088 = vmatprep.mubr.f32.mxu0 0.0
  %1089 = vmatmul.mubr.f32.gmra.mrb[0].mxu0 %v1019
  %v1090 = vpop.f32.mrb[0].mxu0
  %v1091 = vadd.f32 %v1016, %v1090
  %v1092 = vpop.f32.mrb[0].mxu0
  %1093 = vmatprep.mubr.f32.mxu0 0.0
  %1094 = vmatmul.mubr.f32.gmra.mrb[0].mxu0 %v1022
  %v1095 = vpop.f32.mrb[0].mxu0
  %v1096 = vadd.f32 %v1016, %v1095
  %v1097 = vpop.f32.mrb[0].mxu0
  %1098 = vdwg.mxu0
  %v1099 = vtanh.pop %v1091
  %v1100 = vtanh.pop %v1096
  %v1101 = vld [vmem:[%s18] sm:$0xff]
  %v1102 = vld [vmem:[%s18 + $0x8] sm:$0xff]
  %v1103 = vld [vmem:[%s18 + $0x10] sm:$0xff]
  %v1104 = vld [vmem:[%s18 + $0x18] sm:$0xff]
  %v1105 = vld [vmem:[%s19] sm:$0x1]
  %v1107 = vlaneseq
  %v1108 = vshrl.u32 %v1107, 7
  %v1109 = vsub.s32 0, %v1108
  %v1110 = vrot.slane %v1105, %v1109
  %v1113 = vsel %vm69, %v1099, 0
  %v1116 = vsel %vm69, %v1100, 0
  %1118 = vmatprep.subr.mxu0 0.0
  %1119 = vmatpush1.msra.mxu0 %v1101
  %1120 = vmatprep.subr.mxu0 0.0
  %1121 = vmatpush1.msra.mxu0 %v1102
  %1122 = vmatprep.subr.mxu0 0.0
  %1123 = vmatpush1.msra.mxu0 %v1103
  %1124 = vmatprep.subr.mxu0 0.0
  %1125 = vmatpush1.msra.mxu0 %v1104
  %1126 = vmatprep.subr.mxu0 0.0
  %1127 = vmatpush1.msra.mxu0 0.0
  %1128 = vmatprep.subr.mxu0 0.0
  %1129 = vmatpush1.msra.mxu0 0.0
  %1130 = vmatprep.subr.mxu0 0.0
  %1131 = vmatpush1.msra.mxu0 0.0
  %1132 = vmatprep.subr.mxu0 0.0
  %1133 = vmatpush1.msra.mxu0 0.0
  %1134 = vmatprep.subr.mxu0 0.0
  %1135 = vmatpush1.msra.mxu0 0.0
  %1136 = vmatprep.subr.mxu0 0.0
  %1137 = vmatpush1.msra.mxu0 0.0
  %1138 = vmatprep.subr.mxu0 0.0
  %1139 = vmatpush1.msra.mxu0 0.0
  %1140 = vmatprep.subr.mxu0 0.0
  %1141 = vmatpush1.msra.mxu0 0.0
  %1142 = vmatprep.subr.mxu0 0.0
  %1143 = vmatpush1.msra.mxu0 0.0
  %1144 = vmatprep.subr.mxu0 0.0
  %1145 = vmatpush1.msra.mxu0 0.0
  %1146 = vmatprep.subr.mxu0 0.0
  %1147 = vmatpush1.msra.mxu0 0.0
  %1148 = vmatprep.subr.mxu0 0.0
  %1149 = vmatpush1.msra.mxu0 0.0
  %1150 = vmatprep.subr.mxu0 0.0
  %1151 = vmatpush1.msra.mxu0 0.0
  %1152 = vmatprep.subr.mxu0 0.0
  %1153 = vmatpush1.msra.mxu0 0.0
  %1154 = vmatprep.subr.mxu0 0.0
  %1155 = vmatpush1.msra.mxu0 0.0
  %1156 = vmatprep.subr.mxu0 0.0
  %1157 = vmatpush1.msra.mxu0 0.0
  %1158 = vmatprep.subr.mxu0 0.0
  %1159 = vmatpush1.msra.mxu0 0.0
  %1160 = vmatprep.subr.mxu0 0.0
  %1161 = vmatpush1.msra.mxu0 0.0
  %1162 = vmatprep.subr.mxu0 0.0
  %1163 = vmatpush1.msra.mxu0 0.0
  %1164 = vmatprep.subr.mxu0 0.0
  %1165 = vmatpush1.msra.mxu0 0.0
  %1166 = vmatprep.subr.mxu0 0.0
  %1167 = vmatpush1.msra.mxu0 0.0
  %1168 = vmatprep.subr.mxu0 0.0
  %1169 = vmatpush1.msra.mxu0 0.0
  %1170 = vmatprep.subr.mxu0 0.0
  %1171 = vmatpush1.msra.mxu0 0.0
  %1172 = vmatprep.subr.mxu0 0.0
  %1173 = vmatpush1.msra.mxu0 0.0
  %1174 = vmatprep.subr.mxu0 0.0
  %1175 = vmatpush1.msra.mxu0 0.0
  %1176 = vmatprep.subr.mxu0 0.0
  %1177 = vmatpush1.msra.mxu0 0.0
  %1178 = vmatprep.subr.mxu0 0.0
  %1179 = vmatpush1.msra.mxu0 0.0
  %1180 = vmatprep.subr.mxu0 0.0
  %1181 = vmatpush1.msra.mxu0 0.0
  %1182 = vmatprep.mubr.f32.mxu0 0.0
  %1183 = vmatmul.mubr.f32.gmra.mrb[0].mxu0 %v1113
  %v1184 = vpop.f32.mrb[0].mxu0
  %v1185 = vadd.f32 %v1110, %v1184
  %v1186 = vpop.f32.mrb[0].mxu0
  %1187 = vmatprep.mubr.f32.mxu0 0.0
  %1188 = vmatmul.mubr.f32.gmra.mrb[0].mxu0 %v1116
  %v1189 = vpop.f32.mrb[0].mxu0
  %v1190 = vadd.f32 %v1110, %v1189
  %v1191 = vpop.f32.mrb[0].mxu0
  %1192 = vdwg.mxu0
  %1193 = vst [vmem:[%s20] sm:$0xff] %v1185
  %1194 = vst [vmem:[%s20 + $0x8] sm:$0xff] %v1190
  // Predicated region
  $region82: #{bert_classifier_forward.1} parent=0 // pred_check
    _
  $region83: #{bert_classifier_forward.1} parent=0 // pred_check_branch
    %1196 = sbr.rel (0) target = $region85
  $region84: #{bert_classifier_forward.1} parent=0 // pred_region
    _
  $region85: #{bert_classifier_forward.1} parent=0 // pred_fallthru
    _
  // Predicated region
  $region86: #{bert_classifier_forward.1} parent=0 // pred_check
    _
  $region87: #{bert_classifier_forward.1} parent=0 // pred_check_branch
    %1198 = sbr.rel (0) target = $region89
  $region88: #{bert_classifier_forward.1} parent=0 // pred_region
    _
  $region89: #{bert_classifier_forward.1} parent=0 // pred_fallthru
    _

</llo_original>
